<compile_context>
chip_gen: v7x
topology: tpu7x:2x2x1
jax: 0.10.0
libtpu: 0.0.40
codegen_flags: <defaults>
</compile_context>

<pallas_src>
import functools

import jax
import jax.numpy as jnp
from jax.experimental import pallas as pl
from jax.experimental.pallas import tpu as pltpu


def _round_up(x, m):
    return (x + m - 1) // m * m


# ---------------------------------------------------------------------------
# Pallas kernel: tiled matmul + bias with fused epilogue (relu / log_softmax)
# ---------------------------------------------------------------------------
def _linear_kernel(x_ref, w_ref, b_ref, o_ref, acc_ref, *, epilogue, n_valid):
    k = pl.program_id(2)

    @pl.when(k == 0)
    def _():
        acc_ref[...] = jnp.zeros_like(acc_ref)

    acc_ref[...] += jnp.dot(x_ref[...], w_ref[...],
                            preferred_element_type=jnp.float32)

    @pl.when(k == pl.num_programs(2) - 1)
    def _():
        out = acc_ref[...] + b_ref[...]          # (tm, tn) + (1, tn)
        if epilogue == "relu":
            out = jnp.maximum(out, 0.0)
        elif epilogue == "log_softmax":
            # Whole row lives in one N tile; mask the lane-padding columns.
            col = jax.lax.broadcasted_iota(jnp.int32, out.shape, 1)
            valid = col < n_valid
            masked = jnp.where(valid, out, -jnp.inf)
            m = jnp.max(masked, axis=1, keepdims=True)
            ex = jnp.where(valid, jnp.exp(out - m), 0.0)
            lse = m + jnp.log(jnp.sum(ex, axis=1, keepdims=True))
            out = out - lse                      # padded cols sliced off later
        o_ref[...] = out.astype(o_ref.dtype)


def pallas_linear(x, w, b, *, epilogue="none"):
    """y = epilogue(x @ w + b). x: (M, K) f32, w: (K, N) f32, b: (N,) f32."""
    M, K = x.shape
    Kw, N = w.shape
    assert K == Kw, (K, Kw)

    # --- generation-friendly tile sizes (small shapes -> single tile) -------
    Mp = _round_up(M, 8)
    tm = Mp if Mp <= 512 else 256
    Mp = _round_up(Mp, tm)

    Np = _round_up(N, 128)
    tn = Np if Np <= 512 else 256
    Np = _round_up(Np, tn)

    Kp = _round_up(K, 128)
    tk = Kp if Kp <= 1024 else 512
    Kp = _round_up(Kp, tk)

    if epilogue == "log_softmax":
        assert Np == tn, "log_softmax epilogue requires a single N tile"

    # Pad to lane-dense shapes; bf16 inputs, f32 accumulation/bias/output.
    xp = jnp.pad(x, ((0, Mp - M), (0, Kp - K))).astype(jnp.bfloat16)
    wp = jnp.pad(w, ((0, Kp - K), (0, Np - N))).astype(jnp.bfloat16)
    bp = jnp.pad(b.reshape(1, -1).astype(jnp.float32), ((0, 0), (0, Np - N)))

    grid = (Mp // tm, Np // tn, Kp // tk)
    kernel = functools.partial(_linear_kernel, epilogue=epilogue, n_valid=N)

    cost = pl.CostEstimate(
        flops=2 * Mp * Kp * Np,
        transcendentals=Mp * Np if epilogue == "log_softmax" else 0,
        bytes_accessed=xp.size * 2 + wp.size * 2 + bp.size * 4 + Mp * Np * 4,
    )

    out = pl.pallas_call(
        kernel,
        out_shape=jax.ShapeDtypeStruct((Mp, Np), jnp.float32),
        grid_spec=pltpu.PrefetchScalarGridSpec(
            num_scalar_prefetch=0,
            grid=grid,
            in_specs=[
                pl.BlockSpec((tm, tk), lambda i, j, k: (i, k)),
                pl.BlockSpec((tk, tn), lambda i, j, k: (k, j)),
                pl.BlockSpec((1, tn), lambda i, j, k: (0, j)),
            ],
            out_specs=pl.BlockSpec((tm, tn), lambda i, j, k: (i, j)),
            scratch_shapes=[pltpu.VMEM((tm, tn), jnp.float32)],
        ),
        compiler_params=pltpu.CompilerParams(
            dimension_semantics=("parallel", "parallel", "arbitrary")),
        cost_estimate=cost,
    )(xp, wp, bp)

    return out[:M, :N]


# ---------------------------------------------------------------------------
# ANN parameters & forward pass
# ---------------------------------------------------------------------------
def init_ann_params(key):
    def linear_init(k, fan_in, fan_out):
        kw, kb = jax.random.split(k)
        bound = fan_in ** -0.5                   # PyTorch nn.Linear default init
        w = jax.random.uniform(kw, (fan_in, fan_out), jnp.float32, -bound, bound)
        b = jax.random.uniform(kb, (fan_out,), jnp.float32, -bound, bound)
        return w, b

    k1, k2, k3 = jax.random.split(key, 3)
    w1, b1 = linear_init(k1, 784, 500)
    w2, b2 = linear_init(k2, 500, 300)
    w3, b3 = linear_init(k3, 300, 10)
    return {"w1": w1, "b1": b1, "w2": w2, "b2": b2, "w3": w3, "b3": b3}


def ann_forward(x, params):
    """x: any shape with 784 trailing elements per sample -> (B, 10) log-probs."""
    xf = x.reshape(-1, 784)                                  # Reshape(-1, 784)
    h = pallas_linear(xf, params["w1"], params["b1"], epilogue="relu")
    h = pallas_linear(h, params["w2"], params["b2"], epilogue="relu")
    return pallas_linear(h, params["w3"], params["b3"], epilogue="log_softmax")


# ---------------------------------------------------------------------------
# Pure-JAX reference (f32) for correctness check
# ---------------------------------------------------------------------------
def reference_forward(x, params):
    xf = x.reshape(-1, 784)
    h = jnp.maximum(xf @ params["w1"] + params["b1"], 0.0)
    h = jnp.maximum(h @ params["w2"] + params["b2"], 0.0)
    logits = h @ params["w3"] + params["b3"]
    return jax.nn.log_softmax(logits, axis=1)


if __name__ == "__main__":
    key = jax.random.PRNGKey(0)
    kx, kp = jax.random.split(key)

    # MNIST-like input, small batch; Reshape(-1, 784) flattens it.
    x = jax.random.normal(kx, (2, 1, 28, 28), jnp.float32)
    params = init_ann_params(kp)

    out = jax.block_until_ready(ann_forward(x, params))
    ref = jax.block_until_ready(reference_forward(x, params))

    assert out.shape == ref.shape == (2, 10), (out.shape, ref.shape)
    # bf16 matmul inputs with f32 accumulation -> relaxed tolerance on log-probs.
    max_err = float(jnp.max(jnp.abs(out - ref)))
    assert max_err < 5e-2, max_err
    # Log-probs of each row should (approximately) normalize.
    assert float(jnp.max(jnp.abs(jnp.sum(jnp.exp(out), axis=1) - 1.0))) < 1e-2

    print("KERNEL_OK")
</pallas_src>

<mosaic_0001>
module attributes {stable_mosaic.version = 11 : i64} {
  func.func @_linear_kernel(%arg0: i32, %arg1: i32, %arg2: i32, %arg3: memref<8x896xbf16, #tpu.memory_space<vmem>>, %arg4: memref<896x512xbf16, #tpu.memory_space<vmem>>, %arg5: memref<1x512xf32, #tpu.memory_space<vmem>>, %arg6: memref<8x512xf32, #tpu.memory_space<vmem>>, %arg7: memref<8x512xf32, #tpu.memory_space<vmem>>) attributes {dimension_semantics = [#tpu.dimension_semantics<parallel>, #tpu.dimension_semantics<parallel>, #tpu.dimension_semantics<arbitrary>], iteration_bounds = array<i64: 1, 1, 1>, scalar_prefetch = 0 : i64, scratch_operands = 1 : i64, tpu.core_type = #tpu.core_type<tc>, window_params = [{transform_indices = @transform_0, window_bounds = array<i64: 8, 896>}, {transform_indices = @transform_1, window_bounds = array<i64: 896, 512>}, {transform_indices = @transform_2, window_bounds = array<i64: 1, 512>}, {transform_indices = @transform_3, window_bounds = array<i64: 8, 512>}]} {
    %c0_i32 = arith.constant 0 : i32
    %0 = arith.cmpi eq, %arg2, %c0_i32 : i32
    %1 = arith.extui %0 : i1 to i32
    %c0_i32_0 = arith.constant 0 : i32
    %2 = arith.cmpi ne, %1, %c0_i32_0 : i32
    scf.if %2 {
      %cst_10 = arith.constant 0.000000e+00 : f32
      %12 = vector.broadcast %cst_10 : f32 to vector<8x512xf32>
      %c0_11 = arith.constant 0 : index
      %c0_12 = arith.constant 0 : index
      %13 = vector.load %arg7[%c0_11, %c0_12] : memref<8x512xf32, #tpu.memory_space<vmem>>, vector<8x512xf32>
      tpu.vector_store %arg7[%c0_11, %c0_12], %12 {strides = array<i32>} : memref<8x512xf32, #tpu.memory_space<vmem>>, vector<8x512xf32>,
    } else {
    }
    %c0 = arith.constant 0 : index
    %c0_1 = arith.constant 0 : index
    %3 = vector.load %arg7[%c0, %c0_1] : memref<8x512xf32, #tpu.memory_space<vmem>>, vector<8x512xf32>
    %c0_2 = arith.constant 0 : index
    %c0_3 = arith.constant 0 : index
    %4 = vector.load %arg3[%c0_2, %c0_3] : memref<8x896xbf16, #tpu.memory_space<vmem>>, vector<8x896xbf16>
    %c0_4 = arith.constant 0 : index
    %c0_5 = arith.constant 0 : index
    %5 = vector.load %arg4[%c0_4, %c0_5] : memref<896x512xbf16, #tpu.memory_space<vmem>>, vector<896x512xbf16>
    %cst = arith.constant dense<0.000000e+00> : vector<8x512xf32>
    %6 = tpu.matmul %4, %5, %cst {dimension_numbers = #tpu.dot_dimension_numbers<[1], [0], [0], [1], [0, 0, 1, 1], [], []>} : vector<8x896xbf16>, vector<896x512xbf16>, vector<8x512xf32> -> vector<8x512xf32>
    %7 = arith.addf %3, %6 : vector<8x512xf32>
    %c0_6 = arith.constant 0 : index
    %c0_7 = arith.constant 0 : index
    %8 = vector.load %arg7[%c0_6, %c0_7] : memref<8x512xf32, #tpu.memory_space<vmem>>, vector<8x512xf32>
    tpu.vector_store %arg7[%c0_6, %c0_7], %7 {strides = array<i32>} : memref<8x512xf32, #tpu.memory_space<vmem>>, vector<8x512xf32>,
    %c0_i32_8 = arith.constant 0 : i32
    %9 = arith.cmpi eq, %arg2, %c0_i32_8 : i32
    %10 = arith.extui %9 : i1 to i32
    %c0_i32_9 = arith.constant 0 : i32
    %11 = arith.cmpi ne, %10, %c0_i32_9 : i32
    scf.if %11 {
      %c0_10 = arith.constant 0 : index
      %c0_11 = arith.constant 0 : index
      %12 = vector.load %arg7[%c0_10, %c0_11] : memref<8x512xf32, #tpu.memory_space<vmem>>, vector<8x512xf32>
      %c0_12 = arith.constant 0 : index
      %c0_13 = arith.constant 0 : index
      %13 = vector.load %arg5[%c0_12, %c0_13] : memref<1x512xf32, #tpu.memory_space<vmem>>, vector<1x512xf32>
      %14 = vector.broadcast %13 : vector<1x512xf32> to vector<8x512xf32>
      %15 = arith.addf %12, %14 : vector<8x512xf32>
      %cst_14 = arith.constant 0.000000e+00 : f32
      %16 = vector.broadcast %cst_14 : f32 to vector<8x512xf32>
      %17 = arith.maximumf %15, %16 : vector<8x512xf32>
      %c0_15 = arith.constant 0 : index
      %c0_16 = arith.constant 0 : index
      %18 = vector.load %arg6[%c0_15, %c0_16] : memref<8x512xf32, #tpu.memory_space<vmem>>, vector<8x512xf32>
      tpu.vector_store %arg6[%c0_15, %c0_16], %17 {strides = array<i32>} : memref<8x512xf32, #tpu.memory_space<vmem>>, vector<8x512xf32>,
    } else {
    }
    return
  }
  func.func @transform_0(%arg0: i32, %arg1: i32, %arg2: i32) -> (i32, i32) {
    %c0_i32 = arith.constant 0 : i32
    return %arg0, %arg2 : i32, i32
  }
  func.func @transform_1(%arg0: i32, %arg1: i32, %arg2: i32) -> (i32, i32) {
    %c0_i32 = arith.constant 0 : i32
    return %arg2, %arg1 : i32, i32
  }
  func.func @transform_2(%arg0: i32, %arg1: i32, %arg2: i32) -> (i32, i32) {
    %c0_i32 = arith.constant 0 : i32
    %c0_i32_0 = arith.constant 0 : i32
    return %c0_i32, %arg1 : i32, i32
  }
  func.func @transform_3(%arg0: i32, %arg1: i32, %arg2: i32) -> (i32, i32) {
    %c0_i32 = arith.constant 0 : i32
    return %arg0, %arg1 : i32, i32
  }
}

</mosaic_0001>

<llo_original>
// kernel: tpu_custom_call.1
$region0: #{tpu_custom_call.1}
  #allocation0 [shape = 'u32[]', space=smem, size = 0x4, offset = 0x4, fixed_abs, tag = 'smem constant byte address 0x4 - core index']
  #allocation1 [shape = 'u32[144,128]{1,0:T(1,128)}', space=vmem, size = 0x12000, scoped, tag = 'internal scratch']
  #allocation2 [shape = 'f32[8,512]{1,0:T(8,128)}', space=vmem, size = 0x4000, scoped, tag = 'scratch operand']
  %s0 = inlined_call_operand.hbm [shape: bf16[8,896], index: 0, kind: input, shape index: {}]
  %s1 = inlined_call_operand.hbm [shape: bf16[896,512], index: 1, kind: input, shape index: {}]
  %s2 = inlined_call_operand.vmem [shape: f32[1,512], index: 2, kind: input, shape index: {}]
  %s3 = inlined_call_operand.hbm [shape: f32[8,512], index: 3, kind: output, shape index: {}]
  %s4 = sld [smem:[#allocation0]]
  $region38: #{tpu_custom_call.1} parent=0
    _
  %s6 = ssub.s32 1, %s4
  %s7 = scalar_select 0, %s6, %s4
  $region1: #{tpu_custom_call.1} parent=0
    #allocation3 [shape = 'u8[14336]{0}', space=vmem, size = 0x3800, scoped, tag = 'input window, operand 0, single buffered']
    #allocation4 [shape = 's32[1]{0}', space=sflag, size = 0x4, scoped, tag = 'scoped memory for tpu_custom_call.1']
    #allocation5 [shape = 's32[1]{0}', space=sflag, size = 0x4, scoped, tag = 'scoped memory for tpu_custom_call.1']
    #allocation6 [shape = 'u8[917504]{0}', space=vmem, size = 0xe0000, scoped, tag = 'input window, operand 1, single buffered']
    #allocation7 [shape = 's32[1]{0}', space=sflag, size = 0x4, scoped, tag = 'scoped memory for tpu_custom_call.1']
    #allocation8 [shape = 'u8[16384]{0}', space=vmem, size = 0x4000, scoped, tag = 'output window, operand 0, single buffered']
    %8 = vsyncpa [#allocation4], 0
    %9 = vsyncpa [#allocation7], 0
    %10 = vsyncpa [#allocation5], 0
    // Predicated region
    $region2: #{tpu_custom_call.1} parent=1 // pred_check
      _
    $region3: #{tpu_custom_call.1} parent=1 // pred_check_branch
      %12 = sbr.rel (0) target = $region5
    $region4: #{tpu_custom_call.1} parent=1 // pred_region
      %s14 = ssub.s32 448, 448
      %15 = vsyncadd [#allocation4], %s14
      %s17 = sshll.u32 [#allocation3], 4
      %s18 = int_to_ptr.vmem [resolvable:$true] %s17
      %20 = dma.hbm_to_vmem [thread:$0]  %s0, 448, %s18, [#allocation4]
    $region5: #{tpu_custom_call.1} parent=1 // pred_fallthru
      _
    // Predicated region
    $region6: #{tpu_custom_call.1} parent=1 // pred_check
      _
    $region7: #{tpu_custom_call.1} parent=1 // pred_check_branch
      %22 = sbr.rel (0) target = $region9
    $region8: #{tpu_custom_call.1} parent=1 // pred_region
      %s24 = ssub.s32 28672, 28672
      %25 = vsyncadd [#allocation7], %s24
      %s26 = sshll.u32 [#allocation6], 4
      %s27 = int_to_ptr.vmem [resolvable:$true] %s26
      %32 = dma.hbm_to_vmem [thread:$0]  %s1, 28672, %s27, [#allocation7], 256, 256, 16
    $region9: #{tpu_custom_call.1} parent=1 // pred_fallthru
      _
    // Predicated region
    $region10: #{tpu_custom_call.1} parent=1 // pred_check
      _
    $region11: #{tpu_custom_call.1} parent=1 // pred_check_branch
      %34 = sbr.rel (0) target = $region13
    $region12: #{tpu_custom_call.1} parent=1 // pred_region
      _
    $region13: #{tpu_custom_call.1} parent=1 // pred_fallthru
      _
    // Predicated region
    $region14: #{tpu_custom_call.1} parent=1 // pred_check
      _
    $region15: #{tpu_custom_call.1} parent=1 // pred_check_branch
      %36 = sbr.rel (0) target = $region17
    $region16: #{tpu_custom_call.1} parent=1 // pred_region
      %37 = dma.done [#allocation4], 448
    $region17: #{tpu_custom_call.1} parent=1 // pred_fallthru
      _
    // Predicated region
    $region18: #{tpu_custom_call.1} parent=1 // pred_check
      _
    $region19: #{tpu_custom_call.1} parent=1 // pred_check_branch
      %39 = sbr.rel (0) target = $region21
    $region20: #{tpu_custom_call.1} parent=1 // pred_region
      %40 = dma.done [#allocation7], 28672
    $region21: #{tpu_custom_call.1} parent=1 // pred_fallthru
      _
    %p42 = scmp.eq.s32.totalorder 0, 0
    // Predicated region
    $region22: #{tpu_custom_call.1} parent=1 // pred_check
      %p43 = pneg %p42
    $region23: #{tpu_custom_call.1} parent=1 // pred_check_branch
      %45 = sbr.rel (%p43) target = $region25
    $region24: #{tpu_custom_call.1} parent=1 // pred_region
      %46 = vst [vmem:[#allocation2] sm:$0xff] 0.0
      %47 = vst [vmem:[#allocation2 + $0x8] sm:$0xff] 0.0
      %48 = vst [vmem:[#allocation2 + $0x10] sm:$0xff] 0.0
      %49 = vst [vmem:[#allocation2 + $0x18] sm:$0xff] 0.0
    $region25: #{tpu_custom_call.1} parent=1 // pred_fallthru
      _
    %v50 = vld [vmem:[#allocation2] sm:$0xff]
    %v51 = vld [vmem:[#allocation2 + $0x8] sm:$0xff]
    %v52 = vld [vmem:[#allocation2 + $0x10] sm:$0xff]
    %v53 = vld [vmem:[#allocation2 + $0x18] sm:$0xff]
    %v54 = vld [vmem:[#allocation3] sm:$0xff]
    %v55 = vld [vmem:[#allocation3 + $0x8] sm:$0xff]
    %v56 = vld [vmem:[#allocation3 + $0x10] sm:$0xff]
    %v57 = vld [vmem:[#allocation3 + $0x18] sm:$0xf]
    %v58 = vld [vmem:[#allocation6] sm:$0xff]
    %v59 = vld [vmem:[#allocation6 + $0x8] sm:$0xff]
    %v60 = vld [vmem:[#allocation6 + $0x10] sm:$0xff]
    %v61 = vld [vmem:[#allocation6 + $0x18] sm:$0xff]
    %v62 = vld [vmem:[#allocation6 + $0x20] sm:$0xff]
    %v63 = vld [vmem:[#allocation6 + $0x28] sm:$0xff]
    %v64 = vld [vmem:[#allocation6 + $0x30] sm:$0xff]
    %v65 = vld [vmem:[#allocation6 + $0x38] sm:$0xff]
    %v66 = vld [vmem:[#allocation6 + $0x40] sm:$0xff]
    %v67 = vld [vmem:[#allocation6 + $0x48] sm:$0xff]
    %v68 = vld [vmem:[#allocation6 + $0x50] sm:$0xff]
    %v69 = vld [vmem:[#allocation6 + $0x58] sm:$0xff]
    %v70 = vld [vmem:[#allocation6 + $0x60] sm:$0xff]
    %v71 = vld [vmem:[#allocation6 + $0x68] sm:$0xff]
    %v72 = vld [vmem:[#allocation6 + $0x70] sm:$0xff]
    %v73 = vld [vmem:[#allocation6 + $0x78] sm:$0xff]
    %v74 = vld [vmem:[#allocation6 + $0x80] sm:$0xff]
    %v75 = vld [vmem:[#allocation6 + $0x88] sm:$0xff]
    %v76 = vld [vmem:[#allocation6 + $0x90] sm:$0xff]
    %v77 = vld [vmem:[#allocation6 + $0x98] sm:$0xff]
    %v78 = vld [vmem:[#allocation6 + $0xa0] sm:$0xff]
    %v79 = vld [vmem:[#allocation6 + $0xa8] sm:$0xff]
    %v80 = vld [vmem:[#allocation6 + $0xb0] sm:$0xff]
    %v81 = vld [vmem:[#allocation6 + $0xb8] sm:$0xff]
    %v82 = vld [vmem:[#allocation6 + $0xc0] sm:$0xff]
    %v83 = vld [vmem:[#allocation6 + $0xc8] sm:$0xff]
    %v84 = vld [vmem:[#allocation6 + $0xd0] sm:$0xff]
    %v85 = vld [vmem:[#allocation6 + $0xd8] sm:$0xff]
    %v86 = vld [vmem:[#allocation6 + $0xe0] sm:$0xff]
    %v87 = vld [vmem:[#allocation6 + $0xe8] sm:$0xff]
    %v88 = vld [vmem:[#allocation6 + $0xf0] sm:$0xff]
    %v89 = vld [vmem:[#allocation6 + $0xf8] sm:$0xff]
    %v90 = vld [vmem:[#allocation6 + $0x100] sm:$0xff]
    %v91 = vld [vmem:[#allocation6 + $0x108] sm:$0xff]
    %v92 = vld [vmem:[#allocation6 + $0x110] sm:$0xff]
    %v93 = vld [vmem:[#allocation6 + $0x118] sm:$0xff]
    %v94 = vld [vmem:[#allocation6 + $0x120] sm:$0xff]
    %v95 = vld [vmem:[#allocation6 + $0x128] sm:$0xff]
    %v96 = vld [vmem:[#allocation6 + $0x130] sm:$0xff]
    %v97 = vld [vmem:[#allocation6 + $0x138] sm:$0xff]
    %v98 = vld [vmem:[#allocation6 + $0x140] sm:$0xff]
    %v99 = vld [vmem:[#allocation6 + $0x148] sm:$0xff]
    %v100 = vld [vmem:[#allocation6 + $0x150] sm:$0xff]
    %v101 = vld [vmem:[#allocation6 + $0x158] sm:$0xff]
    %v102 = vld [vmem:[#allocation6 + $0x160] sm:$0xff]
    %v103 = vld [vmem:[#allocation6 + $0x168] sm:$0xff]
    %v104 = vld [vmem:[#allocation6 + $0x170] sm:$0xff]
    %v105 = vld [vmem:[#allocation6 + $0x178] sm:$0xff]
    %v106 = vld [vmem:[#allocation6 + $0x180] sm:$0xff]
    %v107 = vld [vmem:[#allocation6 + $0x188] sm:$0xff]
    %v108 = vld [vmem:[#allocation6 + $0x190] sm:$0xff]
    %v109 = vld [vmem:[#allocation6 + $0x198] sm:$0xff]
    %v110 = vld [vmem:[#allocation6 + $0x1a0] sm:$0xff]
    %v111 = vld [vmem:[#allocation6 + $0x1a8] sm:$0xff]
    %v112 = vld [vmem:[#allocation6 + $0x1b0] sm:$0xff]
    %v113 = vld [vmem:[#allocation6 + $0x1b8] sm:$0xff]
    %v114 = vld [vmem:[#allocation6 + $0x1c0] sm:$0xff]
    %v115 = vld [vmem:[#allocation6 + $0x1c8] sm:$0xff]
    %v116 = vld [vmem:[#allocation6 + $0x1d0] sm:$0xff]
    %v117 = vld [vmem:[#allocation6 + $0x1d8] sm:$0xff]
    %v118 = vld [vmem:[#allocation6 + $0x1e0] sm:$0xff]
    %v119 = vld [vmem:[#allocation6 + $0x1e8] sm:$0xff]
    %v120 = vld [vmem:[#allocation6 + $0x1f0] sm:$0xff]
    %v121 = vld [vmem:[#allocation6 + $0x1f8] sm:$0xff]
    %v122 = vld [vmem:[#allocation6 + $0x200] sm:$0xff]
    %v123 = vld [vmem:[#allocation6 + $0x208] sm:$0xff]
    %v124 = vld [vmem:[#allocation6 + $0x210] sm:$0xff]
    %v125 = vld [vmem:[#allocation6 + $0x218] sm:$0xff]
    %v126 = vld [vmem:[#allocation6 + $0x220] sm:$0xff]
    %v127 = vld [vmem:[#allocation6 + $0x228] sm:$0xff]
    %v128 = vld [vmem:[#allocation6 + $0x230] sm:$0xff]
    %v129 = vld [vmem:[#allocation6 + $0x238] sm:$0xff]
    %v130 = vld [vmem:[#allocation6 + $0x240] sm:$0xff]
    %v131 = vld [vmem:[#allocation6 + $0x248] sm:$0xff]
    %v132 = vld [vmem:[#allocation6 + $0x250] sm:$0xff]
    %v133 = vld [vmem:[#allocation6 + $0x258] sm:$0xff]
    %v134 = vld [vmem:[#allocation6 + $0x260] sm:$0xff]
    %v135 = vld [vmem:[#allocation6 + $0x268] sm:$0xff]
    %v136 = vld [vmem:[#allocation6 + $0x270] sm:$0xff]
    %v137 = vld [vmem:[#allocation6 + $0x278] sm:$0xff]
    %v138 = vld [vmem:[#allocation6 + $0x280] sm:$0xff]
    %v139 = vld [vmem:[#allocation6 + $0x288] sm:$0xff]
    %v140 = vld [vmem:[#allocation6 + $0x290] sm:$0xff]
    %v141 = vld [vmem:[#allocation6 + $0x298] sm:$0xff]
    %v142 = vld [vmem:[#allocation6 + $0x2a0] sm:$0xff]
    %v143 = vld [vmem:[#allocation6 + $0x2a8] sm:$0xff]
    %v144 = vld [vmem:[#allocation6 + $0x2b0] sm:$0xff]
    %v145 = vld [vmem:[#allocation6 + $0x2b8] sm:$0xff]
    %v146 = vld [vmem:[#allocation6 + $0x2c0] sm:$0xff]
    %v147 = vld [vmem:[#allocation6 + $0x2c8] sm:$0xff]
    %v148 = vld [vmem:[#allocation6 + $0x2d0] sm:$0xff]
    %v149 = vld [vmem:[#allocation6 + $0x2d8] sm:$0xff]
    %v150 = vld [vmem:[#allocation6 + $0x2e0] sm:$0xff]
    %v151 = vld [vmem:[#allocation6 + $0x2e8] sm:$0xff]
    %v152 = vld [vmem:[#allocation6 + $0x2f0] sm:$0xff]
    %v153 = vld [vmem:[#allocation6 + $0x2f8] sm:$0xff]
    %v154 = vld [vmem:[#allocation6 + $0x300] sm:$0xff]
    %v155 = vld [vmem:[#allocation6 + $0x308] sm:$0xff]
    %v156 = vld [vmem:[#allocation6 + $0x310] sm:$0xff]
    %v157 = vld [vmem:[#allocation6 + $0x318] sm:$0xff]
    %v158 = vld [vmem:[#allocation6 + $0x320] sm:$0xff]
    %v159 = vld [vmem:[#allocation6 + $0x328] sm:$0xff]
    %v160 = vld [vmem:[#allocation6 + $0x330] sm:$0xff]
    %v161 = vld [vmem:[#allocation6 + $0x338] sm:$0xff]
    %v162 = vld [vmem:[#allocation6 + $0x340] sm:$0xff]
    %v163 = vld [vmem:[#allocation6 + $0x348] sm:$0xff]
    %v164 = vld [vmem:[#allocation6 + $0x350] sm:$0xff]
    %v165 = vld [vmem:[#allocation6 + $0x358] sm:$0xff]
    %v166 = vld [vmem:[#allocation6 + $0x360] sm:$0xff]
    %v167 = vld [vmem:[#allocation6 + $0x368] sm:$0xff]
    %v168 = vld [vmem:[#allocation6 + $0x370] sm:$0xff]
    %v169 = vld [vmem:[#allocation6 + $0x378] sm:$0xff]
    %v170 = vld [vmem:[#allocation6 + $0x380] sm:$0xff]
    %v171 = vld [vmem:[#allocation6 + $0x388] sm:$0xff]
    %v172 = vld [vmem:[#allocation6 + $0x390] sm:$0xff]
    %v173 = vld [vmem:[#allocation6 + $0x398] sm:$0xff]
    %v174 = vld [vmem:[#allocation6 + $0x3a0] sm:$0xff]
    %v175 = vld [vmem:[#allocation6 + $0x3a8] sm:$0xff]
    %v176 = vld [vmem:[#allocation6 + $0x3b0] sm:$0xff]
    %v177 = vld [vmem:[#allocation6 + $0x3b8] sm:$0xff]
    %v178 = vld [vmem:[#allocation6 + $0x3c0] sm:$0xff]
    %v179 = vld [vmem:[#allocation6 + $0x3c8] sm:$0xff]
    %v180 = vld [vmem:[#allocation6 + $0x3d0] sm:$0xff]
    %v181 = vld [vmem:[#allocation6 + $0x3d8] sm:$0xff]
    %v182 = vld [vmem:[#allocation6 + $0x3e0] sm:$0xff]
    %v183 = vld [vmem:[#allocation6 + $0x3e8] sm:$0xff]
    %v184 = vld [vmem:[#allocation6 + $0x3f0] sm:$0xff]
    %v185 = vld [vmem:[#allocation6 + $0x3f8] sm:$0xff]
    %v186 = vld [vmem:[#allocation6 + $0x400] sm:$0xff]
    %v187 = vld [vmem:[#allocation6 + $0x408] sm:$0xff]
    %v188 = vld [vmem:[#allocation6 + $0x410] sm:$0xff]
    %v189 = vld [vmem:[#allocation6 + $0x418] sm:$0xff]
    %v190 = vld [vmem:[#allocation6 + $0x420] sm:$0xff]
    %v191 = vld [vmem:[#allocation6 + $0x428] sm:$0xff]
    %v192 = vld [vmem:[#allocation6 + $0x430] sm:$0xff]
    %v193 = vld [vmem:[#allocation6 + $0x438] sm:$0xff]
    %v194 = vld [vmem:[#allocation6 + $0x440] sm:$0xff]
    %v195 = vld [vmem:[#allocation6 + $0x448] sm:$0xff]
    %v196 = vld [vmem:[#allocation6 + $0x450] sm:$0xff]
    %v197 = vld [vmem:[#allocation6 + $0x458] sm:$0xff]
    %v198 = vld [vmem:[#allocation6 + $0x460] sm:$0xff]
    %v199 = vld [vmem:[#allocation6 + $0x468] sm:$0xff]
    %v200 = vld [vmem:[#allocation6 + $0x470] sm:$0xff]
    %v201 = vld [vmem:[#allocation6 + $0x478] sm:$0xff]
    %v202 = vld [vmem:[#allocation6 + $0x480] sm:$0xff]
    %v203 = vld [vmem:[#allocation6 + $0x488] sm:$0xff]
    %v204 = vld [vmem:[#allocation6 + $0x490] sm:$0xff]
    %v205 = vld [vmem:[#allocation6 + $0x498] sm:$0xff]
    %v206 = vld [vmem:[#allocation6 + $0x4a0] sm:$0xff]
    %v207 = vld [vmem:[#allocation6 + $0x4a8] sm:$0xff]
    %v208 = vld [vmem:[#allocation6 + $0x4b0] sm:$0xff]
    %v209 = vld [vmem:[#allocation6 + $0x4b8] sm:$0xff]
    %v210 = vld [vmem:[#allocation6 + $0x4c0] sm:$0xff]
    %v211 = vld [vmem:[#allocation6 + $0x4c8] sm:$0xff]
    %v212 = vld [vmem:[#allocation6 + $0x4d0] sm:$0xff]
    %v213 = vld [vmem:[#allocation6 + $0x4d8] sm:$0xff]
    %v214 = vld [vmem:[#allocation6 + $0x4e0] sm:$0xff]
    %v215 = vld [vmem:[#allocation6 + $0x4e8] sm:$0xff]
    %v216 = vld [vmem:[#allocation6 + $0x4f0] sm:$0xff]
    %v217 = vld [vmem:[#allocation6 + $0x4f8] sm:$0xff]
    %v218 = vld [vmem:[#allocation6 + $0x500] sm:$0xff]
    %v219 = vld [vmem:[#allocation6 + $0x508] sm:$0xff]
    %v220 = vld [vmem:[#allocation6 + $0x510] sm:$0xff]
    %v221 = vld [vmem:[#allocation6 + $0x518] sm:$0xff]
    %v222 = vld [vmem:[#allocation6 + $0x520] sm:$0xff]
    %v223 = vld [vmem:[#allocation6 + $0x528] sm:$0xff]
    %v224 = vld [vmem:[#allocation6 + $0x530] sm:$0xff]
    %v225 = vld [vmem:[#allocation6 + $0x538] sm:$0xff]
    %v226 = vld [vmem:[#allocation6 + $0x540] sm:$0xff]
    %v227 = vld [vmem:[#allocation6 + $0x548] sm:$0xff]
    %v228 = vld [vmem:[#allocation6 + $0x550] sm:$0xff]
    %v229 = vld [vmem:[#allocation6 + $0x558] sm:$0xff]
    %v230 = vld [vmem:[#allocation6 + $0x560] sm:$0xff]
    %v231 = vld [vmem:[#allocation6 + $0x568] sm:$0xff]
    %v232 = vld [vmem:[#allocation6 + $0x570] sm:$0xff]
    %v233 = vld [vmem:[#allocation6 + $0x578] sm:$0xff]
    %v234 = vld [vmem:[#allocation6 + $0x580] sm:$0xff]
    %v235 = vld [vmem:[#allocation6 + $0x588] sm:$0xff]
    %v236 = vld [vmem:[#allocation6 + $0x590] sm:$0xff]
    %v237 = vld [vmem:[#allocation6 + $0x598] sm:$0xff]
    %v238 = vld [vmem:[#allocation6 + $0x5a0] sm:$0xff]
    %v239 = vld [vmem:[#allocation6 + $0x5a8] sm:$0xff]
    %v240 = vld [vmem:[#allocation6 + $0x5b0] sm:$0xff]
    %v241 = vld [vmem:[#allocation6 + $0x5b8] sm:$0xff]
    %v242 = vld [vmem:[#allocation6 + $0x5c0] sm:$0xff]
    %v243 = vld [vmem:[#allocation6 + $0x5c8] sm:$0xff]
    %v244 = vld [vmem:[#allocation6 + $0x5d0] sm:$0xff]
    %v245 = vld [vmem:[#allocation6 + $0x5d8] sm:$0xff]
    %v246 = vld [vmem:[#allocation6 + $0x5e0] sm:$0xff]
    %v247 = vld [vmem:[#allocation6 + $0x5e8] sm:$0xff]
    %v248 = vld [vmem:[#allocation6 + $0x5f0] sm:$0xff]
    %v249 = vld [vmem:[#allocation6 + $0x5f8] sm:$0xff]
    %v250 = vld [vmem:[#allocation6 + $0x600] sm:$0xff]
    %v251 = vld [vmem:[#allocation6 + $0x608] sm:$0xff]
    %v252 = vld [vmem:[#allocation6 + $0x610] sm:$0xff]
    %v253 = vld [vmem:[#allocation6 + $0x618] sm:$0xff]
    %v254 = vld [vmem:[#allocation6 + $0x620] sm:$0xff]
    %v255 = vld [vmem:[#allocation6 + $0x628] sm:$0xff]
    %v256 = vld [vmem:[#allocation6 + $0x630] sm:$0xff]
    %v257 = vld [vmem:[#allocation6 + $0x638] sm:$0xff]
    %v258 = vld [vmem:[#allocation6 + $0x640] sm:$0xff]
    %v259 = vld [vmem:[#allocation6 + $0x648] sm:$0xff]
    %v260 = vld [vmem:[#allocation6 + $0x650] sm:$0xff]
    %v261 = vld [vmem:[#allocation6 + $0x658] sm:$0xff]
    %v262 = vld [vmem:[#allocation6 + $0x660] sm:$0xff]
    %v263 = vld [vmem:[#allocation6 + $0x668] sm:$0xff]
    %v264 = vld [vmem:[#allocation6 + $0x670] sm:$0xff]
    %v265 = vld [vmem:[#allocation6 + $0x678] sm:$0xff]
    %v266 = vld [vmem:[#allocation6 + $0x680] sm:$0xff]
    %v267 = vld [vmem:[#allocation6 + $0x688] sm:$0xff]
    %v268 = vld [vmem:[#allocation6 + $0x690] sm:$0xff]
    %v269 = vld [vmem:[#allocation6 + $0x698] sm:$0xff]
    %v270 = vld [vmem:[#allocation6 + $0x6a0] sm:$0xff]
    %v271 = vld [vmem:[#allocation6 + $0x6a8] sm:$0xff]
    %v272 = vld [vmem:[#allocation6 + $0x6b0] sm:$0xff]
    %v273 = vld [vmem:[#allocation6 + $0x6b8] sm:$0xff]
    %v274 = vld [vmem:[#allocation6 + $0x6c0] sm:$0xff]
    %v275 = vld [vmem:[#allocation6 + $0x6c8] sm:$0xff]
    %v276 = vld [vmem:[#allocation6 + $0x6d0] sm:$0xff]
    %v277 = vld [vmem:[#allocation6 + $0x6d8] sm:$0xff]
    %v278 = vld [vmem:[#allocation6 + $0x6e0] sm:$0xff]
    %v279 = vld [vmem:[#allocation6 + $0x6e8] sm:$0xff]
    %v280 = vld [vmem:[#allocation6 + $0x6f0] sm:$0xff]
    %v281 = vld [vmem:[#allocation6 + $0x6f8] sm:$0xff]
    %v286 = vunpack.c.l.b16 %v54
    %v287 = vunpack.c.h.b16 %v54
    %v288 = vunpack.c.l.b16 %v55
    %v289 = vunpack.c.h.b16 %v55
    %v290 = vunpack.c.l.b16 %v56
    %v291 = vunpack.c.h.b16 %v56
    %v292 = vunpack.c.l.b16 %v57
    %v293 = vpack.c.b16 %v286, %v286
    %v294 = vpack.c.b16 %v287, %v287
    %v295 = vpack.c.b16 %v288, %v288
    %v296 = vpack.c.b16 %v289, %v289
    %v297 = vpack.c.b16 %v290, %v290
    %v298 = vpack.c.b16 %v291, %v291
    %v299 = vpack.c.b16 %v292, %v292
    %v531 = vunpack.c.l.b16 %v58
    %v532 = vunpack.c.h.b16 %v58
    %v533 = vunpack.c.l.b16 %v59
    %v534 = vunpack.c.h.b16 %v59
    %v535 = vunpack.c.l.b16 %v60
    %v536 = vunpack.c.h.b16 %v60
    %v537 = vunpack.c.l.b16 %v61
    %v538 = vunpack.c.h.b16 %v61
    %v539 = vunpack.c.l.b16 %v62
    %v540 = vunpack.c.h.b16 %v62
    %v541 = vunpack.c.l.b16 %v63
    %v542 = vunpack.c.h.b16 %v63
    %v543 = vunpack.c.l.b16 %v64
    %v544 = vunpack.c.h.b16 %v64
    %v545 = vunpack.c.l.b16 %v65
    %v546 = vunpack.c.h.b16 %v65
    %v547 = vunpack.c.l.b16 %v66
    %v548 = vunpack.c.h.b16 %v66
    %v549 = vunpack.c.l.b16 %v67
    %v550 = vunpack.c.h.b16 %v67
    %v551 = vunpack.c.l.b16 %v68
    %v552 = vunpack.c.h.b16 %v68
    %v553 = vunpack.c.l.b16 %v69
    %v554 = vunpack.c.h.b16 %v69
    %v555 = vunpack.c.l.b16 %v70
    %v556 = vunpack.c.h.b16 %v70
    %v557 = vunpack.c.l.b16 %v71
    %v558 = vunpack.c.h.b16 %v71
    %v559 = vunpack.c.l.b16 %v72
    %v560 = vunpack.c.h.b16 %v72
    %v561 = vunpack.c.l.b16 %v73
    %v562 = vunpack.c.h.b16 %v73
    %v563 = vunpack.c.l.b16 %v74
    %v564 = vunpack.c.h.b16 %v74
    %v565 = vunpack.c.l.b16 %v75
    %v566 = vunpack.c.h.b16 %v75
    %v567 = vunpack.c.l.b16 %v76
    %v568 = vunpack.c.h.b16 %v76
    %v569 = vunpack.c.l.b16 %v77
    %v570 = vunpack.c.h.b16 %v77
    %v571 = vunpack.c.l.b16 %v78
    %v572 = vunpack.c.h.b16 %v78
    %v573 = vunpack.c.l.b16 %v79
    %v574 = vunpack.c.h.b16 %v79
    %v575 = vunpack.c.l.b16 %v80
    %v576 = vunpack.c.h.b16 %v80
    %v577 = vunpack.c.l.b16 %v81
    %v578 = vunpack.c.h.b16 %v81
    %v579 = vunpack.c.l.b16 %v82
    %v580 = vunpack.c.h.b16 %v82
    %v581 = vunpack.c.l.b16 %v83
    %v582 = vunpack.c.h.b16 %v83
    %v583 = vunpack.c.l.b16 %v84
    %v584 = vunpack.c.h.b16 %v84
    %v585 = vunpack.c.l.b16 %v85
    %v586 = vunpack.c.h.b16 %v85
    %v587 = vunpack.c.l.b16 %v86
    %v588 = vunpack.c.h.b16 %v86
    %v589 = vunpack.c.l.b16 %v87
    %v590 = vunpack.c.h.b16 %v87
    %v591 = vunpack.c.l.b16 %v88
    %v592 = vunpack.c.h.b16 %v88
    %v593 = vunpack.c.l.b16 %v89
    %v594 = vunpack.c.h.b16 %v89
    %v595 = vunpack.c.l.b16 %v90
    %v596 = vunpack.c.h.b16 %v90
    %v597 = vunpack.c.l.b16 %v91
    %v598 = vunpack.c.h.b16 %v91
    %v599 = vunpack.c.l.b16 %v92
    %v600 = vunpack.c.h.b16 %v92
    %v601 = vunpack.c.l.b16 %v93
    %v602 = vunpack.c.h.b16 %v93
    %v603 = vunpack.c.l.b16 %v94
    %v604 = vunpack.c.h.b16 %v94
    %v605 = vunpack.c.l.b16 %v95
    %v606 = vunpack.c.h.b16 %v95
    %v607 = vunpack.c.l.b16 %v96
    %v608 = vunpack.c.h.b16 %v96
    %v609 = vunpack.c.l.b16 %v97
    %v610 = vunpack.c.h.b16 %v97
    %v611 = vunpack.c.l.b16 %v98
    %v612 = vunpack.c.h.b16 %v98
    %v613 = vunpack.c.l.b16 %v99
    %v614 = vunpack.c.h.b16 %v99
    %v615 = vunpack.c.l.b16 %v100
    %v616 = vunpack.c.h.b16 %v100
    %v617 = vunpack.c.l.b16 %v101
    %v618 = vunpack.c.h.b16 %v101
    %v619 = vunpack.c.l.b16 %v102
    %v620 = vunpack.c.h.b16 %v102
    %v621 = vunpack.c.l.b16 %v103
    %v622 = vunpack.c.h.b16 %v103
    %v623 = vunpack.c.l.b16 %v104
    %v624 = vunpack.c.h.b16 %v104
    %v625 = vunpack.c.l.b16 %v105
    %v626 = vunpack.c.h.b16 %v105
    %v627 = vunpack.c.l.b16 %v106
    %v628 = vunpack.c.h.b16 %v106
    %v629 = vunpack.c.l.b16 %v107
    %v630 = vunpack.c.h.b16 %v107
    %v631 = vunpack.c.l.b16 %v108
    %v632 = vunpack.c.h.b16 %v108
    %v633 = vunpack.c.l.b16 %v109
    %v634 = vunpack.c.h.b16 %v109
    %v635 = vunpack.c.l.b16 %v110
    %v636 = vunpack.c.h.b16 %v110
    %v637 = vunpack.c.l.b16 %v111
    %v638 = vunpack.c.h.b16 %v111
    %v639 = vunpack.c.l.b16 %v112
    %v640 = vunpack.c.h.b16 %v112
    %v641 = vunpack.c.l.b16 %v113
    %v642 = vunpack.c.h.b16 %v113
    %v643 = vunpack.c.l.b16 %v114
    %v644 = vunpack.c.h.b16 %v114
    %v645 = vunpack.c.l.b16 %v115
    %v646 = vunpack.c.h.b16 %v115
    %v647 = vunpack.c.l.b16 %v116
    %v648 = vunpack.c.h.b16 %v116
    %v649 = vunpack.c.l.b16 %v117
    %v650 = vunpack.c.h.b16 %v117
    %v651 = vunpack.c.l.b16 %v118
    %v652 = vunpack.c.h.b16 %v118
    %v653 = vunpack.c.l.b16 %v119
    %v654 = vunpack.c.h.b16 %v119
    %v655 = vunpack.c.l.b16 %v120
    %v656 = vunpack.c.h.b16 %v120
    %v657 = vunpack.c.l.b16 %v121
    %v658 = vunpack.c.h.b16 %v121
    %v659 = vunpack.c.l.b16 %v122
    %v660 = vunpack.c.h.b16 %v122
    %v661 = vunpack.c.l.b16 %v123
    %v662 = vunpack.c.h.b16 %v123
    %v663 = vunpack.c.l.b16 %v124
    %v664 = vunpack.c.h.b16 %v124
    %v665 = vunpack.c.l.b16 %v125
    %v666 = vunpack.c.h.b16 %v125
    %v667 = vunpack.c.l.b16 %v126
    %v668 = vunpack.c.h.b16 %v126
    %v669 = vunpack.c.l.b16 %v127
    %v670 = vunpack.c.h.b16 %v127
    %v671 = vunpack.c.l.b16 %v128
    %v672 = vunpack.c.h.b16 %v128
    %v673 = vunpack.c.l.b16 %v129
    %v674 = vunpack.c.h.b16 %v129
    %v675 = vunpack.c.l.b16 %v130
    %v676 = vunpack.c.h.b16 %v130
    %v677 = vunpack.c.l.b16 %v131
    %v678 = vunpack.c.h.b16 %v131
    %v679 = vunpack.c.l.b16 %v132
    %v680 = vunpack.c.h.b16 %v132
    %v681 = vunpack.c.l.b16 %v133
    %v682 = vunpack.c.h.b16 %v133
    %v683 = vunpack.c.l.b16 %v134
    %v684 = vunpack.c.h.b16 %v134
    %v685 = vunpack.c.l.b16 %v135
    %v686 = vunpack.c.h.b16 %v135
    %v687 = vunpack.c.l.b16 %v136
    %v688 = vunpack.c.h.b16 %v136
    %v689 = vunpack.c.l.b16 %v137
    %v690 = vunpack.c.h.b16 %v137
    %v691 = vunpack.c.l.b16 %v138
    %v692 = vunpack.c.h.b16 %v138
    %v693 = vunpack.c.l.b16 %v139
    %v694 = vunpack.c.h.b16 %v139
    %v695 = vunpack.c.l.b16 %v140
    %v696 = vunpack.c.h.b16 %v140
    %v697 = vunpack.c.l.b16 %v141
    %v698 = vunpack.c.h.b16 %v141
    %v699 = vunpack.c.l.b16 %v142
    %v700 = vunpack.c.h.b16 %v142
    %v701 = vunpack.c.l.b16 %v143
    %v702 = vunpack.c.h.b16 %v143
    %v703 = vunpack.c.l.b16 %v144
    %v704 = vunpack.c.h.b16 %v144
    %v705 = vunpack.c.l.b16 %v145
    %v706 = vunpack.c.h.b16 %v145
    %v707 = vunpack.c.l.b16 %v146
    %v708 = vunpack.c.h.b16 %v146
    %v709 = vunpack.c.l.b16 %v147
    %v710 = vunpack.c.h.b16 %v147
    %v711 = vunpack.c.l.b16 %v148
    %v712 = vunpack.c.h.b16 %v148
    %v713 = vunpack.c.l.b16 %v149
    %v714 = vunpack.c.h.b16 %v149
    %v715 = vunpack.c.l.b16 %v150
    %v716 = vunpack.c.h.b16 %v150
    %v717 = vunpack.c.l.b16 %v151
    %v718 = vunpack.c.h.b16 %v151
    %v719 = vunpack.c.l.b16 %v152
    %v720 = vunpack.c.h.b16 %v152
    %v721 = vunpack.c.l.b16 %v153
    %v722 = vunpack.c.h.b16 %v153
    %v723 = vunpack.c.l.b16 %v154
    %v724 = vunpack.c.h.b16 %v154
    %v725 = vunpack.c.l.b16 %v155
    %v726 = vunpack.c.h.b16 %v155
    %v727 = vunpack.c.l.b16 %v156
    %v728 = vunpack.c.h.b16 %v156
    %v729 = vunpack.c.l.b16 %v157
    %v730 = vunpack.c.h.b16 %v157
    %v731 = vunpack.c.l.b16 %v158
    %v732 = vunpack.c.h.b16 %v158
    %v733 = vunpack.c.l.b16 %v159
    %v734 = vunpack.c.h.b16 %v159
    %v735 = vunpack.c.l.b16 %v160
    %v736 = vunpack.c.h.b16 %v160
    %v737 = vunpack.c.l.b16 %v161
    %v738 = vunpack.c.h.b16 %v161
    %v739 = vunpack.c.l.b16 %v162
    %v740 = vunpack.c.h.b16 %v162
    %v741 = vunpack.c.l.b16 %v163
    %v742 = vunpack.c.h.b16 %v163
    %v743 = vunpack.c.l.b16 %v164
    %v744 = vunpack.c.h.b16 %v164
    %v745 = vunpack.c.l.b16 %v165
    %v746 = vunpack.c.h.b16 %v165
    %v747 = vunpack.c.l.b16 %v166
    %v748 = vunpack.c.h.b16 %v166
    %v749 = vunpack.c.l.b16 %v167
    %v750 = vunpack.c.h.b16 %v167
    %v751 = vunpack.c.l.b16 %v168
    %v752 = vunpack.c.h.b16 %v168
    %v753 = vunpack.c.l.b16 %v169
    %v754 = vunpack.c.h.b16 %v169
    %v755 = vunpack.c.l.b16 %v170
    %v756 = vunpack.c.h.b16 %v170
    %v757 = vunpack.c.l.b16 %v171
    %v758 = vunpack.c.h.b16 %v171
    %v759 = vunpack.c.l.b16 %v172
    %v760 = vunpack.c.h.b16 %v172
    %v761 = vunpack.c.l.b16 %v173
    %v762 = vunpack.c.h.b16 %v173
    %v763 = vunpack.c.l.b16 %v174
    %v764 = vunpack.c.h.b16 %v174
    %v765 = vunpack.c.l.b16 %v175
    %v766 = vunpack.c.h.b16 %v175
    %v767 = vunpack.c.l.b16 %v176
    %v768 = vunpack.c.h.b16 %v176
    %v769 = vunpack.c.l.b16 %v177
    %v770 = vunpack.c.h.b16 %v177
    %v771 = vunpack.c.l.b16 %v178
    %v772 = vunpack.c.h.b16 %v178
    %v773 = vunpack.c.l.b16 %v179
    %v774 = vunpack.c.h.b16 %v179
    %v775 = vunpack.c.l.b16 %v180
    %v776 = vunpack.c.h.b16 %v180
    %v777 = vunpack.c.l.b16 %v181
    %v778 = vunpack.c.h.b16 %v181
    %v779 = vunpack.c.l.b16 %v182
    %v780 = vunpack.c.h.b16 %v182
    %v781 = vunpack.c.l.b16 %v183
    %v782 = vunpack.c.h.b16 %v183
    %v783 = vunpack.c.l.b16 %v184
    %v784 = vunpack.c.h.b16 %v184
    %v785 = vunpack.c.l.b16 %v185
    %v786 = vunpack.c.h.b16 %v185
    %v787 = vunpack.c.l.b16 %v186
    %v788 = vunpack.c.h.b16 %v186
    %v789 = vunpack.c.l.b16 %v187
    %v790 = vunpack.c.h.b16 %v187
    %v791 = vunpack.c.l.b16 %v188
    %v792 = vunpack.c.h.b16 %v188
    %v793 = vunpack.c.l.b16 %v189
    %v794 = vunpack.c.h.b16 %v189
    %v795 = vunpack.c.l.b16 %v190
    %v796 = vunpack.c.h.b16 %v190
    %v797 = vunpack.c.l.b16 %v191
    %v798 = vunpack.c.h.b16 %v191
    %v799 = vunpack.c.l.b16 %v192
    %v800 = vunpack.c.h.b16 %v192
    %v801 = vunpack.c.l.b16 %v193
    %v802 = vunpack.c.h.b16 %v193
    %v803 = vunpack.c.l.b16 %v194
    %v804 = vunpack.c.h.b16 %v194
    %v805 = vunpack.c.l.b16 %v195
    %v806 = vunpack.c.h.b16 %v195
    %v807 = vunpack.c.l.b16 %v196
    %v808 = vunpack.c.h.b16 %v196
    %v809 = vunpack.c.l.b16 %v197
    %v810 = vunpack.c.h.b16 %v197
    %v811 = vunpack.c.l.b16 %v198
    %v812 = vunpack.c.h.b16 %v198
    %v813 = vunpack.c.l.b16 %v199
    %v814 = vunpack.c.h.b16 %v199
    %v815 = vunpack.c.l.b16 %v200
    %v816 = vunpack.c.h.b16 %v200
    %v817 = vunpack.c.l.b16 %v201
    %v818 = vunpack.c.h.b16 %v201
    %v819 = vunpack.c.l.b16 %v202
    %v820 = vunpack.c.h.b16 %v202
    %v821 = vunpack.c.l.b16 %v203
    %v822 = vunpack.c.h.b16 %v203
    %v823 = vunpack.c.l.b16 %v204
    %v824 = vunpack.c.h.b16 %v204
    %v825 = vunpack.c.l.b16 %v205
    %v826 = vunpack.c.h.b16 %v205
    %v827 = vunpack.c.l.b16 %v206
    %v828 = vunpack.c.h.b16 %v206
    %v829 = vunpack.c.l.b16 %v207
    %v830 = vunpack.c.h.b16 %v207
    %v831 = vunpack.c.l.b16 %v208
    %v832 = vunpack.c.h.b16 %v208
    %v833 = vunpack.c.l.b16 %v209
    %v834 = vunpack.c.h.b16 %v209
    %v835 = vunpack.c.l.b16 %v210
    %v836 = vunpack.c.h.b16 %v210
    %v837 = vunpack.c.l.b16 %v211
    %v838 = vunpack.c.h.b16 %v211
    %v839 = vunpack.c.l.b16 %v212
    %v840 = vunpack.c.h.b16 %v212
    %v841 = vunpack.c.l.b16 %v213
    %v842 = vunpack.c.h.b16 %v213
    %v843 = vunpack.c.l.b16 %v214
    %v844 = vunpack.c.h.b16 %v214
    %v845 = vunpack.c.l.b16 %v215
    %v846 = vunpack.c.h.b16 %v215
    %v847 = vunpack.c.l.b16 %v216
    %v848 = vunpack.c.h.b16 %v216
    %v849 = vunpack.c.l.b16 %v217
    %v850 = vunpack.c.h.b16 %v217
    %v851 = vunpack.c.l.b16 %v218
    %v852 = vunpack.c.h.b16 %v218
    %v853 = vunpack.c.l.b16 %v219
    %v854 = vunpack.c.h.b16 %v219
    %v855 = vunpack.c.l.b16 %v220
    %v856 = vunpack.c.h.b16 %v220
    %v857 = vunpack.c.l.b16 %v221
    %v858 = vunpack.c.h.b16 %v221
    %v859 = vunpack.c.l.b16 %v222
    %v860 = vunpack.c.h.b16 %v222
    %v861 = vunpack.c.l.b16 %v223
    %v862 = vunpack.c.h.b16 %v223
    %v863 = vunpack.c.l.b16 %v224
    %v864 = vunpack.c.h.b16 %v224
    %v865 = vunpack.c.l.b16 %v225
    %v866 = vunpack.c.h.b16 %v225
    %v867 = vunpack.c.l.b16 %v226
    %v868 = vunpack.c.h.b16 %v226
    %v869 = vunpack.c.l.b16 %v227
    %v870 = vunpack.c.h.b16 %v227
    %v871 = vunpack.c.l.b16 %v228
    %v872 = vunpack.c.h.b16 %v228
    %v873 = vunpack.c.l.b16 %v229
    %v874 = vunpack.c.h.b16 %v229
    %v875 = vunpack.c.l.b16 %v230
    %v876 = vunpack.c.h.b16 %v230
    %v877 = vunpack.c.l.b16 %v231
    %v878 = vunpack.c.h.b16 %v231
    %v879 = vunpack.c.l.b16 %v232
    %v880 = vunpack.c.h.b16 %v232
    %v881 = vunpack.c.l.b16 %v233
    %v882 = vunpack.c.h.b16 %v233
    %v883 = vunpack.c.l.b16 %v234
    %v884 = vunpack.c.h.b16 %v234
    %v885 = vunpack.c.l.b16 %v235
    %v886 = vunpack.c.h.b16 %v235
    %v887 = vunpack.c.l.b16 %v236
    %v888 = vunpack.c.h.b16 %v236
    %v889 = vunpack.c.l.b16 %v237
    %v890 = vunpack.c.h.b16 %v237
    %v891 = vunpack.c.l.b16 %v238
    %v892 = vunpack.c.h.b16 %v238
    %v893 = vunpack.c.l.b16 %v239
    %v894 = vunpack.c.h.b16 %v239
    %v895 = vunpack.c.l.b16 %v240
    %v896 = vunpack.c.h.b16 %v240
    %v897 = vunpack.c.l.b16 %v241
    %v898 = vunpack.c.h.b16 %v241
    %v899 = vunpack.c.l.b16 %v242
    %v900 = vunpack.c.h.b16 %v242
    %v901 = vunpack.c.l.b16 %v243
    %v902 = vunpack.c.h.b16 %v243
    %v903 = vunpack.c.l.b16 %v244
    %v904 = vunpack.c.h.b16 %v244
    %v905 = vunpack.c.l.b16 %v245
    %v906 = vunpack.c.h.b16 %v245
    %v907 = vunpack.c.l.b16 %v246
    %v908 = vunpack.c.h.b16 %v246
    %v909 = vunpack.c.l.b16 %v247
    %v910 = vunpack.c.h.b16 %v247
    %v911 = vunpack.c.l.b16 %v248
    %v912 = vunpack.c.h.b16 %v248
    %v913 = vunpack.c.l.b16 %v249
    %v914 = vunpack.c.h.b16 %v249
    %v915 = vunpack.c.l.b16 %v250
    %v916 = vunpack.c.h.b16 %v250
    %v917 = vunpack.c.l.b16 %v251
    %v918 = vunpack.c.h.b16 %v251
    %v919 = vunpack.c.l.b16 %v252
    %v920 = vunpack.c.h.b16 %v252
    %v921 = vunpack.c.l.b16 %v253
    %v922 = vunpack.c.h.b16 %v253
    %v923 = vunpack.c.l.b16 %v254
    %v924 = vunpack.c.h.b16 %v254
    %v925 = vunpack.c.l.b16 %v255
    %v926 = vunpack.c.h.b16 %v255
    %v927 = vunpack.c.l.b16 %v256
    %v928 = vunpack.c.h.b16 %v256
    %v929 = vunpack.c.l.b16 %v257
    %v930 = vunpack.c.h.b16 %v257
    %v931 = vunpack.c.l.b16 %v258
    %v932 = vunpack.c.h.b16 %v258
    %v933 = vunpack.c.l.b16 %v259
    %v934 = vunpack.c.h.b16 %v259
    %v935 = vunpack.c.l.b16 %v260
    %v936 = vunpack.c.h.b16 %v260
    %v937 = vunpack.c.l.b16 %v261
    %v938 = vunpack.c.h.b16 %v261
    %v939 = vunpack.c.l.b16 %v262
    %v940 = vunpack.c.h.b16 %v262
    %v941 = vunpack.c.l.b16 %v263
    %v942 = vunpack.c.h.b16 %v263
    %v943 = vunpack.c.l.b16 %v264
    %v944 = vunpack.c.h.b16 %v264
    %v945 = vunpack.c.l.b16 %v265
    %v946 = vunpack.c.h.b16 %v265
    %v947 = vunpack.c.l.b16 %v266
    %v948 = vunpack.c.h.b16 %v266
    %v949 = vunpack.c.l.b16 %v267
    %v950 = vunpack.c.h.b16 %v267
    %v951 = vunpack.c.l.b16 %v268
    %v952 = vunpack.c.h.b16 %v268
    %v953 = vunpack.c.l.b16 %v269
    %v954 = vunpack.c.h.b16 %v269
    %v955 = vunpack.c.l.b16 %v270
    %v956 = vunpack.c.h.b16 %v270
    %v957 = vunpack.c.l.b16 %v271
    %v958 = vunpack.c.h.b16 %v271
    %v959 = vunpack.c.l.b16 %v272
    %v960 = vunpack.c.h.b16 %v272
    %v961 = vunpack.c.l.b16 %v273
    %v962 = vunpack.c.h.b16 %v273
    %v963 = vunpack.c.l.b16 %v274
    %v964 = vunpack.c.h.b16 %v274
    %v965 = vunpack.c.l.b16 %v275
    %v966 = vunpack.c.h.b16 %v275
    %v967 = vunpack.c.l.b16 %v276
    %v968 = vunpack.c.h.b16 %v276
    %v969 = vunpack.c.l.b16 %v277
    %v970 = vunpack.c.h.b16 %v277
    %v971 = vunpack.c.l.b16 %v278
    %v972 = vunpack.c.h.b16 %v278
    %v973 = vunpack.c.l.b16 %v279
    %v974 = vunpack.c.h.b16 %v279
    %v975 = vunpack.c.l.b16 %v280
    %v976 = vunpack.c.h.b16 %v280
    %v977 = vunpack.c.l.b16 %v281
    %v978 = vunpack.c.h.b16 %v281
    %v979 = vpack.c.b16 %v535, %v531
    %v980 = vpack.c.b16 %v536, %v532
    %v981 = vpack.c.b16 %v537, %v533
    %v982 = vpack.c.b16 %v538, %v534
    %v983 = vpack.c.b16 %v543, %v539
    %v984 = vpack.c.b16 %v544, %v540
    %v985 = vpack.c.b16 %v545, %v541
    %v986 = vpack.c.b16 %v546, %v542
    %v987 = vpack.c.b16 %v551, %v547
    %v988 = vpack.c.b16 %v552, %v548
    %v989 = vpack.c.b16 %v553, %v549
    %v990 = vpack.c.b16 %v554, %v550
    %v991 = vpack.c.b16 %v559, %v555
    %v992 = vpack.c.b16 %v560, %v556
    %v993 = vpack.c.b16 %v561, %v557
    %v994 = vpack.c.b16 %v562, %v558
    %v995 = vpack.c.b16 %v567, %v563
    %v996 = vpack.c.b16 %v568, %v564
    %v997 = vpack.c.b16 %v569, %v565
    %v998 = vpack.c.b16 %v570, %v566
    %v999 = vpack.c.b16 %v575, %v571
    %v1000 = vpack.c.b16 %v576, %v572
    %v1001 = vpack.c.b16 %v577, %v573
    %v1002 = vpack.c.b16 %v578, %v574
    %v1003 = vpack.c.b16 %v583, %v579
    %v1004 = vpack.c.b16 %v584, %v580
    %v1005 = vpack.c.b16 %v585, %v581
    %v1006 = vpack.c.b16 %v586, %v582
    %v1007 = vpack.c.b16 %v591, %v587
    %v1008 = vpack.c.b16 %v592, %v588
    %v1009 = vpack.c.b16 %v593, %v589
    %v1010 = vpack.c.b16 %v594, %v590
    %v1011 = vpack.c.b16 %v599, %v595
    %v1012 = vpack.c.b16 %v600, %v596
    %v1013 = vpack.c.b16 %v601, %v597
    %v1014 = vpack.c.b16 %v602, %v598
    %v1015 = vpack.c.b16 %v607, %v603
    %v1016 = vpack.c.b16 %v608, %v604
    %v1017 = vpack.c.b16 %v609, %v605
    %v1018 = vpack.c.b16 %v610, %v606
    %v1019 = vpack.c.b16 %v615, %v611
    %v1020 = vpack.c.b16 %v616, %v612
    %v1021 = vpack.c.b16 %v617, %v613
    %v1022 = vpack.c.b16 %v618, %v614
    %v1023 = vpack.c.b16 %v623, %v619
    %v1024 = vpack.c.b16 %v624, %v620
    %v1025 = vpack.c.b16 %v625, %v621
    %v1026 = vpack.c.b16 %v626, %v622
    %v1027 = vpack.c.b16 %v631, %v627
    %v1028 = vpack.c.b16 %v632, %v628
    %v1029 = vpack.c.b16 %v633, %v629
    %v1030 = vpack.c.b16 %v634, %v630
    %v1031 = vpack.c.b16 %v639, %v635
    %v1032 = vpack.c.b16 %v640, %v636
    %v1033 = vpack.c.b16 %v641, %v637
    %v1034 = vpack.c.b16 %v642, %v638
    %v1035 = vpack.c.b16 %v647, %v643
    %v1036 = vpack.c.b16 %v648, %v644
    %v1037 = vpack.c.b16 %v649, %v645
    %v1038 = vpack.c.b16 %v650, %v646
    %v1039 = vpack.c.b16 %v655, %v651
    %v1040 = vpack.c.b16 %v656, %v652
    %v1041 = vpack.c.b16 %v657, %v653
    %v1042 = vpack.c.b16 %v658, %v654
    %v1043 = vpack.c.b16 %v663, %v659
    %v1044 = vpack.c.b16 %v664, %v660
    %v1045 = vpack.c.b16 %v665, %v661
    %v1046 = vpack.c.b16 %v666, %v662
    %v1047 = vpack.c.b16 %v671, %v667
    %v1048 = vpack.c.b16 %v672, %v668
    %v1049 = vpack.c.b16 %v673, %v669
    %v1050 = vpack.c.b16 %v674, %v670
    %v1051 = vpack.c.b16 %v679, %v675
    %v1052 = vpack.c.b16 %v680, %v676
    %v1053 = vpack.c.b16 %v681, %v677
    %v1054 = vpack.c.b16 %v682, %v678
    %v1055 = vpack.c.b16 %v687, %v683
    %v1056 = vpack.c.b16 %v688, %v684
    %v1057 = vpack.c.b16 %v689, %v685
    %v1058 = vpack.c.b16 %v690, %v686
    %v1059 = vpack.c.b16 %v695, %v691
    %v1060 = vpack.c.b16 %v696, %v692
    %v1061 = vpack.c.b16 %v697, %v693
    %v1062 = vpack.c.b16 %v698, %v694
    %v1063 = vpack.c.b16 %v703, %v699
    %v1064 = vpack.c.b16 %v704, %v700
    %v1065 = vpack.c.b16 %v705, %v701
    %v1066 = vpack.c.b16 %v706, %v702
    %v1067 = vpack.c.b16 %v711, %v707
    %v1068 = vpack.c.b16 %v712, %v708
    %v1069 = vpack.c.b16 %v713, %v709
    %v1070 = vpack.c.b16 %v714, %v710
    %v1071 = vpack.c.b16 %v719, %v715
    %v1072 = vpack.c.b16 %v720, %v716
    %v1073 = vpack.c.b16 %v721, %v717
    %v1074 = vpack.c.b16 %v722, %v718
    %v1075 = vpack.c.b16 %v727, %v723
    %v1076 = vpack.c.b16 %v728, %v724
    %v1077 = vpack.c.b16 %v729, %v725
    %v1078 = vpack.c.b16 %v730, %v726
    %v1079 = vpack.c.b16 %v735, %v731
    %v1080 = vpack.c.b16 %v736, %v732
    %v1081 = vpack.c.b16 %v737, %v733
    %v1082 = vpack.c.b16 %v738, %v734
    %v1083 = vpack.c.b16 %v743, %v739
    %v1084 = vpack.c.b16 %v744, %v740
    %v1085 = vpack.c.b16 %v745, %v741
    %v1086 = vpack.c.b16 %v746, %v742
    %v1087 = vpack.c.b16 %v751, %v747
    %v1088 = vpack.c.b16 %v752, %v748
    %v1089 = vpack.c.b16 %v753, %v749
    %v1090 = vpack.c.b16 %v754, %v750
    %v1091 = vpack.c.b16 %v759, %v755
    %v1092 = vpack.c.b16 %v760, %v756
    %v1093 = vpack.c.b16 %v761, %v757
    %v1094 = vpack.c.b16 %v762, %v758
    %v1095 = vpack.c.b16 %v767, %v763
    %v1096 = vpack.c.b16 %v768, %v764
    %v1097 = vpack.c.b16 %v769, %v765
    %v1098 = vpack.c.b16 %v770, %v766
    %v1099 = vpack.c.b16 %v775, %v771
    %v1100 = vpack.c.b16 %v776, %v772
    %v1101 = vpack.c.b16 %v777, %v773
    %v1102 = vpack.c.b16 %v778, %v774
    %v1103 = vpack.c.b16 %v783, %v779
    %v1104 = vpack.c.b16 %v784, %v780
    %v1105 = vpack.c.b16 %v785, %v781
    %v1106 = vpack.c.b16 %v786, %v782
    %v1107 = vpack.c.b16 %v791, %v787
    %v1108 = vpack.c.b16 %v792, %v788
    %v1109 = vpack.c.b16 %v793, %v789
    %v1110 = vpack.c.b16 %v794, %v790
    %v1111 = vpack.c.b16 %v799, %v795
    %v1112 = vpack.c.b16 %v800, %v796
    %v1113 = vpack.c.b16 %v801, %v797
    %v1114 = vpack.c.b16 %v802, %v798
    %v1115 = vpack.c.b16 %v807, %v803
    %v1116 = vpack.c.b16 %v808, %v804
    %v1117 = vpack.c.b16 %v809, %v805
    %v1118 = vpack.c.b16 %v810, %v806
    %v1119 = vpack.c.b16 %v815, %v811
    %v1120 = vpack.c.b16 %v816, %v812
    %v1121 = vpack.c.b16 %v817, %v813
    %v1122 = vpack.c.b16 %v818, %v814
    %v1123 = vpack.c.b16 %v823, %v819
    %v1124 = vpack.c.b16 %v824, %v820
    %v1125 = vpack.c.b16 %v825, %v821
    %v1126 = vpack.c.b16 %v826, %v822
    %v1127 = vpack.c.b16 %v831, %v827
    %v1128 = vpack.c.b16 %v832, %v828
    %v1129 = vpack.c.b16 %v833, %v829
    %v1130 = vpack.c.b16 %v834, %v830
    %v1131 = vpack.c.b16 %v839, %v835
    %v1132 = vpack.c.b16 %v840, %v836
    %v1133 = vpack.c.b16 %v841, %v837
    %v1134 = vpack.c.b16 %v842, %v838
    %v1135 = vpack.c.b16 %v847, %v843
    %v1136 = vpack.c.b16 %v848, %v844
    %v1137 = vpack.c.b16 %v849, %v845
    %v1138 = vpack.c.b16 %v850, %v846
    %v1139 = vpack.c.b16 %v855, %v851
    %v1140 = vpack.c.b16 %v856, %v852
    %v1141 = vpack.c.b16 %v857, %v853
    %v1142 = vpack.c.b16 %v858, %v854
    %v1143 = vpack.c.b16 %v863, %v859
    %v1144 = vpack.c.b16 %v864, %v860
    %v1145 = vpack.c.b16 %v865, %v861
    %v1146 = vpack.c.b16 %v866, %v862
    %v1147 = vpack.c.b16 %v871, %v867
    %v1148 = vpack.c.b16 %v872, %v868
    %v1149 = vpack.c.b16 %v873, %v869
    %v1150 = vpack.c.b16 %v874, %v870
    %v1151 = vpack.c.b16 %v879, %v875
    %v1152 = vpack.c.b16 %v880, %v876
    %v1153 = vpack.c.b16 %v881, %v877
    %v1154 = vpack.c.b16 %v882, %v878
    %v1155 = vpack.c.b16 %v887, %v883
    %v1156 = vpack.c.b16 %v888, %v884
    %v1157 = vpack.c.b16 %v889, %v885
    %v1158 = vpack.c.b16 %v890, %v886
    %v1159 = vpack.c.b16 %v895, %v891
    %v1160 = vpack.c.b16 %v896, %v892
    %v1161 = vpack.c.b16 %v897, %v893
    %v1162 = vpack.c.b16 %v898, %v894
    %v1163 = vpack.c.b16 %v903, %v899
    %v1164 = vpack.c.b16 %v904, %v900
    %v1165 = vpack.c.b16 %v905, %v901
    %v1166 = vpack.c.b16 %v906, %v902
    %v1167 = vpack.c.b16 %v911, %v907
    %v1168 = vpack.c.b16 %v912, %v908
    %v1169 = vpack.c.b16 %v913, %v909
    %v1170 = vpack.c.b16 %v914, %v910
    %v1171 = vpack.c.b16 %v919, %v915
    %v1172 = vpack.c.b16 %v920, %v916
    %v1173 = vpack.c.b16 %v921, %v917
    %v1174 = vpack.c.b16 %v922, %v918
    %v1175 = vpack.c.b16 %v927, %v923
    %v1176 = vpack.c.b16 %v928, %v924
    %v1177 = vpack.c.b16 %v929, %v925
    %v1178 = vpack.c.b16 %v930, %v926
    %v1179 = vpack.c.b16 %v935, %v931
    %v1180 = vpack.c.b16 %v936, %v932
    %v1181 = vpack.c.b16 %v937, %v933
    %v1182 = vpack.c.b16 %v938, %v934
    %v1183 = vpack.c.b16 %v943, %v939
    %v1184 = vpack.c.b16 %v944, %v940
    %v1185 = vpack.c.b16 %v945, %v941
    %v1186 = vpack.c.b16 %v946, %v942
    %v1187 = vpack.c.b16 %v951, %v947
    %v1188 = vpack.c.b16 %v952, %v948
    %v1189 = vpack.c.b16 %v953, %v949
    %v1190 = vpack.c.b16 %v954, %v950
    %v1191 = vpack.c.b16 %v959, %v955
    %v1192 = vpack.c.b16 %v960, %v956
    %v1193 = vpack.c.b16 %v961, %v957
    %v1194 = vpack.c.b16 %v962, %v958
    %v1195 = vpack.c.b16 %v967, %v963
    %v1196 = vpack.c.b16 %v968, %v964
    %v1197 = vpack.c.b16 %v969, %v965
    %v1198 = vpack.c.b16 %v970, %v966
    %v1199 = vpack.c.b16 %v975, %v971
    %v1200 = vpack.c.b16 %v976, %v972
    %v1201 = vpack.c.b16 %v977, %v973
    %v1202 = vpack.c.b16 %v978, %v974
    %1427 = vmatprep.subr.bf16.mxu0 %v980
    %1428 = vmatpush1.bf16.msra.mxu0 %v979
    %1429 = vmatprep.subr.bf16.mxu0 %v984
    %1430 = vmatpush1.bf16.msra.mxu0 %v983
    %1431 = vmatprep.subr.bf16.mxu0 %v988
    %1432 = vmatpush1.bf16.msra.mxu0 %v987
    %1433 = vmatprep.subr.bf16.mxu0 %v992
    %1434 = vmatpush1.bf16.msra.mxu0 %v991
    %1435 = vmatprep.subr.bf16.mxu0 %v996
    %1436 = vmatpush1.bf16.msra.mxu0 %v995
    %1437 = vmatprep.subr.bf16.mxu0 %v1000
    %1438 = vmatpush1.bf16.msra.mxu0 %v999
    %1439 = vmatprep.subr.bf16.mxu0 %v1004
    %1440 = vmatpush1.bf16.msra.mxu0 %v1003
    %1441 = vmatprep.subr.bf16.mxu0 %v1008
    %1442 = vmatpush1.bf16.msra.mxu0 %v1007
    %1443 = vmatprep.subr.bf16.mxu0 %v1012
    %1444 = vmatpush1.bf16.msra.mxu0 %v1011
    %1445 = vmatprep.subr.bf16.mxu0 %v1016
    %1446 = vmatpush1.bf16.msra.mxu0 %v1015
    %1447 = vmatprep.subr.bf16.mxu0 %v1020
    %1448 = vmatpush1.bf16.msra.mxu0 %v1019
    %1449 = vmatprep.subr.bf16.mxu0 %v1024
    %1450 = vmatpush1.bf16.msra.mxu0 %v1023
    %1451 = vmatprep.subr.bf16.mxu0 %v1028
    %1452 = vmatpush1.bf16.msra.mxu0 %v1027
    %1453 = vmatprep.subr.bf16.mxu0 %v1032
    %1454 = vmatpush1.bf16.msra.mxu0 %v1031
    %1455 = vmatprep.subr.bf16.mxu0 %v1036
    %1456 = vmatpush1.bf16.msra.mxu0 %v1035
    %1457 = vmatprep.subr.bf16.mxu0 %v1040
    %1458 = vmatpush1.bf16.msra.mxu0 %v1039
    %1459 = vmatprep.mubr.bf16.mxu0 %v294
    %1460 = vmatmul.mubr.bf16.gmra.mrb[0].mxu0 %v293
    %v1461 = vpop.f32.mrb[0].mxu0
    %v1462 = vadd.f32 0.0, %v1461
    %v1463 = vpop.f32.mrb[0].mxu0
    %v1464 = vadd.f32 0.0, %v1463
    %v1465 = vpop.f32.mrb[0].mxu0
    %v1466 = vpop.f32.mrb[0].mxu0
    %1467 = vdwg.mxu0
    %1468 = vmatprep.subr.bf16.mxu0 %v1044
    %1469 = vmatpush1.bf16.msra.mxu0 %v1043
    %1470 = vmatprep.subr.bf16.mxu0 %v1048
    %1471 = vmatpush1.bf16.msra.mxu0 %v1047
    %1472 = vmatprep.subr.bf16.mxu0 %v1052
    %1473 = vmatpush1.bf16.msra.mxu0 %v1051
    %1474 = vmatprep.subr.bf16.mxu0 %v1056
    %1475 = vmatpush1.bf16.msra.mxu0 %v1055
    %1476 = vmatprep.subr.bf16.mxu0 %v1060
    %1477 = vmatpush1.bf16.msra.mxu0 %v1059
    %1478 = vmatprep.subr.bf16.mxu0 %v1064
    %1479 = vmatpush1.bf16.msra.mxu0 %v1063
    %1480 = vmatprep.subr.bf16.mxu0 %v1068
    %1481 = vmatpush1.bf16.msra.mxu0 %v1067
    %1482 = vmatprep.subr.bf16.mxu0 %v1072
    %1483 = vmatpush1.bf16.msra.mxu0 %v1071
    %1484 = vmatprep.subr.bf16.mxu0 %v1076
    %1485 = vmatpush1.bf16.msra.mxu0 %v1075
    %1486 = vmatprep.subr.bf16.mxu0 %v1080
    %1487 = vmatpush1.bf16.msra.mxu0 %v1079
    %1488 = vmatprep.subr.bf16.mxu0 %v1084
    %1489 = vmatpush1.bf16.msra.mxu0 %v1083
    %1490 = vmatprep.subr.bf16.mxu0 %v1088
    %1491 = vmatpush1.bf16.msra.mxu0 %v1087
    %1492 = vmatprep.subr.bf16.mxu0 %v1092
    %1493 = vmatpush1.bf16.msra.mxu0 %v1091
    %1494 = vmatprep.subr.bf16.mxu0 %v1096
    %1495 = vmatpush1.bf16.msra.mxu0 %v1095
    %1496 = vmatprep.subr.bf16.mxu0 %v1100
    %1497 = vmatpush1.bf16.msra.mxu0 %v1099
    %1498 = vmatprep.subr.bf16.mxu0 %v1104
    %1499 = vmatpush1.bf16.msra.mxu0 %v1103
    %1500 = vmatprep.mubr.bf16.mxu0 %v296
    %1501 = vmatmul.mubr.bf16.gmra.mrb[0].mxu0 %v295
    %v1502 = vpop.f32.mrb[0].mxu0
    %v1503 = vadd.f32 %v1462, %v1502
    %v1504 = vpop.f32.mrb[0].mxu0
    %v1505 = vadd.f32 %v1464, %v1504
    %v1506 = vpop.f32.mrb[0].mxu0
    %v1507 = vpop.f32.mrb[0].mxu0
    %1508 = vdwg.mxu0
    %1509 = vmatprep.subr.bf16.mxu0 %v1108
    %1510 = vmatpush1.bf16.msra.mxu0 %v1107
    %1511 = vmatprep.subr.bf16.mxu0 %v1112
    %1512 = vmatpush1.bf16.msra.mxu0 %v1111
    %1513 = vmatprep.subr.bf16.mxu0 %v1116
    %1514 = vmatpush1.bf16.msra.mxu0 %v1115
    %1515 = vmatprep.subr.bf16.mxu0 %v1120
    %1516 = vmatpush1.bf16.msra.mxu0 %v1119
    %1517 = vmatprep.subr.bf16.mxu0 %v1124
    %1518 = vmatpush1.bf16.msra.mxu0 %v1123
    %1519 = vmatprep.subr.bf16.mxu0 %v1128
    %1520 = vmatpush1.bf16.msra.mxu0 %v1127
    %1521 = vmatprep.subr.bf16.mxu0 %v1132
    %1522 = vmatpush1.bf16.msra.mxu0 %v1131
    %1523 = vmatprep.subr.bf16.mxu0 %v1136
    %1524 = vmatpush1.bf16.msra.mxu0 %v1135
    %1525 = vmatprep.subr.bf16.mxu0 %v1140
    %1526 = vmatpush1.bf16.msra.mxu0 %v1139
    %1527 = vmatprep.subr.bf16.mxu0 %v1144
    %1528 = vmatpush1.bf16.msra.mxu0 %v1143
    %1529 = vmatprep.subr.bf16.mxu0 %v1148
    %1530 = vmatpush1.bf16.msra.mxu0 %v1147
    %1531 = vmatprep.subr.bf16.mxu0 %v1152
    %1532 = vmatpush1.bf16.msra.mxu0 %v1151
    %1533 = vmatprep.subr.bf16.mxu0 %v1156
    %1534 = vmatpush1.bf16.msra.mxu0 %v1155
    %1535 = vmatprep.subr.bf16.mxu0 %v1160
    %1536 = vmatpush1.bf16.msra.mxu0 %v1159
    %1537 = vmatprep.subr.bf16.mxu0 %v1164
    %1538 = vmatpush1.bf16.msra.mxu0 %v1163
    %1539 = vmatprep.subr.bf16.mxu0 %v1168
    %1540 = vmatpush1.bf16.msra.mxu0 %v1167
    %1541 = vmatprep.mubr.bf16.mxu0 %v298
    %1542 = vmatmul.mubr.bf16.gmra.mrb[0].mxu0 %v297
    %v1543 = vpop.f32.mrb[0].mxu0
    %v1544 = vadd.f32 %v1503, %v1543
    %v1545 = vpop.f32.mrb[0].mxu0
    %v1546 = vadd.f32 %v1505, %v1545
    %v1547 = vpop.f32.mrb[0].mxu0
    %v1548 = vpop.f32.mrb[0].mxu0
    %1549 = vdwg.mxu0
    %1550 = vmatprep.subr.bf16.mxu0 %v1172
    %1551 = vmatpush1.bf16.msra.mxu0 %v1171
    %1552 = vmatprep.subr.bf16.mxu0 %v1176
    %1553 = vmatpush1.bf16.msra.mxu0 %v1175
    %1554 = vmatprep.subr.bf16.mxu0 %v1180
    %1555 = vmatpush1.bf16.msra.mxu0 %v1179
    %1556 = vmatprep.subr.bf16.mxu0 %v1184
    %1557 = vmatpush1.bf16.msra.mxu0 %v1183
    %1558 = vmatprep.subr.bf16.mxu0 %v1188
    %1559 = vmatpush1.bf16.msra.mxu0 %v1187
    %1560 = vmatprep.subr.bf16.mxu0 %v1192
    %1561 = vmatpush1.bf16.msra.mxu0 %v1191
    %1562 = vmatprep.subr.bf16.mxu0 %v1196
    %1563 = vmatpush1.bf16.msra.mxu0 %v1195
    %1564 = vmatprep.subr.bf16.mxu0 %v1200
    %1565 = vmatpush1.bf16.msra.mxu0 %v1199
    %1566 = vmatprep.subr.bf16.mxu0 0
    %1567 = vmatpush1.bf16.msra.mxu0 0
    %1568 = vmatprep.subr.bf16.mxu0 0
    %1569 = vmatpush1.bf16.msra.mxu0 0
    %1570 = vmatprep.subr.bf16.mxu0 0
    %1571 = vmatpush1.bf16.msra.mxu0 0
    %1572 = vmatprep.subr.bf16.mxu0 0
    %1573 = vmatpush1.bf16.msra.mxu0 0
    %1574 = vmatprep.subr.bf16.mxu0 0
    %1575 = vmatpush1.bf16.msra.mxu0 0
    %1576 = vmatprep.subr.bf16.mxu0 0
    %1577 = vmatpush1.bf16.msra.mxu0 0
    %1578 = vmatprep.subr.bf16.mxu0 0
    %1579 = vmatpush1.bf16.msra.mxu0 0
    %1580 = vmatprep.subr.bf16.mxu0 0
    %1581 = vmatpush1.bf16.msra.mxu0 0
    %1582 = vmatprep.mubr.bf16.mxu0 0
    %1583 = vmatmul.mubr.bf16.gmra.mrb[0].mxu0 %v299
    %v1584 = vpop.f32.mrb[0].mxu0
    %v1585 = vadd.f32 %v1544, %v1584
    %v1586 = vpop.f32.mrb[0].mxu0
    %v1587 = vadd.f32 %v1546, %v1586
    %v1588 = vpop.f32.mrb[0].mxu0
    %v1589 = vpop.f32.mrb[0].mxu0
    %1590 = vdwg.mxu0
    %1591 = vmatprep.subr.bf16.mxu0 %v982
    %1592 = vmatpush1.bf16.msra.mxu0 %v981
    %1593 = vmatprep.subr.bf16.mxu0 %v986
    %1594 = vmatpush1.bf16.msra.mxu0 %v985
    %1595 = vmatprep.subr.bf16.mxu0 %v990
    %1596 = vmatpush1.bf16.msra.mxu0 %v989
    %1597 = vmatprep.subr.bf16.mxu0 %v994
    %1598 = vmatpush1.bf16.msra.mxu0 %v993
    %1599 = vmatprep.subr.bf16.mxu0 %v998
    %1600 = vmatpush1.bf16.msra.mxu0 %v997
    %1601 = vmatprep.subr.bf16.mxu0 %v1002
    %1602 = vmatpush1.bf16.msra.mxu0 %v1001
    %1603 = vmatprep.subr.bf16.mxu0 %v1006
    %1604 = vmatpush1.bf16.msra.mxu0 %v1005
    %1605 = vmatprep.subr.bf16.mxu0 %v1010
    %1606 = vmatpush1.bf16.msra.mxu0 %v1009
    %1607 = vmatprep.subr.bf16.mxu0 %v1014
    %1608 = vmatpush1.bf16.msra.mxu0 %v1013
    %1609 = vmatprep.subr.bf16.mxu0 %v1018
    %1610 = vmatpush1.bf16.msra.mxu0 %v1017
    %1611 = vmatprep.subr.bf16.mxu0 %v1022
    %1612 = vmatpush1.bf16.msra.mxu0 %v1021
    %1613 = vmatprep.subr.bf16.mxu0 %v1026
    %1614 = vmatpush1.bf16.msra.mxu0 %v1025
    %1615 = vmatprep.subr.bf16.mxu0 %v1030
    %1616 = vmatpush1.bf16.msra.mxu0 %v1029
    %1617 = vmatprep.subr.bf16.mxu0 %v1034
    %1618 = vmatpush1.bf16.msra.mxu0 %v1033
    %1619 = vmatprep.subr.bf16.mxu0 %v1038
    %1620 = vmatpush1.bf16.msra.mxu0 %v1037
    %1621 = vmatprep.subr.bf16.mxu0 %v1042
    %1622 = vmatpush1.bf16.msra.mxu0 %v1041
    %1623 = vmatprep.mubr.bf16.mxu0 %v294
    %1624 = vmatmul.mubr.bf16.gmra.mrb[0].mxu0 %v293
    %v1625 = vpop.f32.mrb[0].mxu0
    %v1626 = vadd.f32 0.0, %v1625
    %v1627 = vpop.f32.mrb[0].mxu0
    %v1628 = vadd.f32 0.0, %v1627
    %v1629 = vpop.f32.mrb[0].mxu0
    %v1630 = vpop.f32.mrb[0].mxu0
    %1631 = vdwg.mxu0
    %1632 = vmatprep.subr.bf16.mxu0 %v1046
    %1633 = vmatpush1.bf16.msra.mxu0 %v1045
    %1634 = vmatprep.subr.bf16.mxu0 %v1050
    %1635 = vmatpush1.bf16.msra.mxu0 %v1049
    %1636 = vmatprep.subr.bf16.mxu0 %v1054
    %1637 = vmatpush1.bf16.msra.mxu0 %v1053
    %1638 = vmatprep.subr.bf16.mxu0 %v1058
    %1639 = vmatpush1.bf16.msra.mxu0 %v1057
    %1640 = vmatprep.subr.bf16.mxu0 %v1062
    %1641 = vmatpush1.bf16.msra.mxu0 %v1061
    %1642 = vmatprep.subr.bf16.mxu0 %v1066
    %1643 = vmatpush1.bf16.msra.mxu0 %v1065
    %1644 = vmatprep.subr.bf16.mxu0 %v1070
    %1645 = vmatpush1.bf16.msra.mxu0 %v1069
    %1646 = vmatprep.subr.bf16.mxu0 %v1074
    %1647 = vmatpush1.bf16.msra.mxu0 %v1073
    %1648 = vmatprep.subr.bf16.mxu0 %v1078
    %1649 = vmatpush1.bf16.msra.mxu0 %v1077
    %1650 = vmatprep.subr.bf16.mxu0 %v1082
    %1651 = vmatpush1.bf16.msra.mxu0 %v1081
    %1652 = vmatprep.subr.bf16.mxu0 %v1086
    %1653 = vmatpush1.bf16.msra.mxu0 %v1085
    %1654 = vmatprep.subr.bf16.mxu0 %v1090
    %1655 = vmatpush1.bf16.msra.mxu0 %v1089
    %1656 = vmatprep.subr.bf16.mxu0 %v1094
    %1657 = vmatpush1.bf16.msra.mxu0 %v1093
    %1658 = vmatprep.subr.bf16.mxu0 %v1098
    %1659 = vmatpush1.bf16.msra.mxu0 %v1097
    %1660 = vmatprep.subr.bf16.mxu0 %v1102
    %1661 = vmatpush1.bf16.msra.mxu0 %v1101
    %1662 = vmatprep.subr.bf16.mxu0 %v1106
    %1663 = vmatpush1.bf16.msra.mxu0 %v1105
    %1664 = vmatprep.mubr.bf16.mxu0 %v296
    %1665 = vmatmul.mubr.bf16.gmra.mrb[0].mxu0 %v295
    %v1666 = vpop.f32.mrb[0].mxu0
    %v1667 = vadd.f32 %v1626, %v1666
    %v1668 = vpop.f32.mrb[0].mxu0
    %v1669 = vadd.f32 %v1628, %v1668
    %v1670 = vpop.f32.mrb[0].mxu0
    %v1671 = vpop.f32.mrb[0].mxu0
    %1672 = vdwg.mxu0
    %1673 = vmatprep.subr.bf16.mxu0 %v1110
    %1674 = vmatpush1.bf16.msra.mxu0 %v1109
    %1675 = vmatprep.subr.bf16.mxu0 %v1114
    %1676 = vmatpush1.bf16.msra.mxu0 %v1113
    %1677 = vmatprep.subr.bf16.mxu0 %v1118
    %1678 = vmatpush1.bf16.msra.mxu0 %v1117
    %1679 = vmatprep.subr.bf16.mxu0 %v1122
    %1680 = vmatpush1.bf16.msra.mxu0 %v1121
    %1681 = vmatprep.subr.bf16.mxu0 %v1126
    %1682 = vmatpush1.bf16.msra.mxu0 %v1125
    %1683 = vmatprep.subr.bf16.mxu0 %v1130
    %1684 = vmatpush1.bf16.msra.mxu0 %v1129
    %1685 = vmatprep.subr.bf16.mxu0 %v1134
    %1686 = vmatpush1.bf16.msra.mxu0 %v1133
    %1687 = vmatprep.subr.bf16.mxu0 %v1138
    %1688 = vmatpush1.bf16.msra.mxu0 %v1137
    %1689 = vmatprep.subr.bf16.mxu0 %v1142
    %1690 = vmatpush1.bf16.msra.mxu0 %v1141
    %1691 = vmatprep.subr.bf16.mxu0 %v1146
    %1692 = vmatpush1.bf16.msra.mxu0 %v1145
    %1693 = vmatprep.subr.bf16.mxu0 %v1150
    %1694 = vmatpush1.bf16.msra.mxu0 %v1149
    %1695 = vmatprep.subr.bf16.mxu0 %v1154
    %1696 = vmatpush1.bf16.msra.mxu0 %v1153
    %1697 = vmatprep.subr.bf16.mxu0 %v1158
    %1698 = vmatpush1.bf16.msra.mxu0 %v1157
    %1699 = vmatprep.subr.bf16.mxu0 %v1162
    %1700 = vmatpush1.bf16.msra.mxu0 %v1161
    %1701 = vmatprep.subr.bf16.mxu0 %v1166
    %1702 = vmatpush1.bf16.msra.mxu0 %v1165
    %1703 = vmatprep.subr.bf16.mxu0 %v1170
    %1704 = vmatpush1.bf16.msra.mxu0 %v1169
    %1705 = vmatprep.mubr.bf16.mxu0 %v298
    %1706 = vmatmul.mubr.bf16.gmra.mrb[0].mxu0 %v297
    %v1707 = vpop.f32.mrb[0].mxu0
    %v1708 = vadd.f32 %v1667, %v1707
    %v1709 = vpop.f32.mrb[0].mxu0
    %v1710 = vadd.f32 %v1669, %v1709
    %v1711 = vpop.f32.mrb[0].mxu0
    %v1712 = vpop.f32.mrb[0].mxu0
    %1713 = vdwg.mxu0
    %1714 = vmatprep.subr.bf16.mxu0 %v1174
    %1715 = vmatpush1.bf16.msra.mxu0 %v1173
    %1716 = vmatprep.subr.bf16.mxu0 %v1178
    %1717 = vmatpush1.bf16.msra.mxu0 %v1177
    %1718 = vmatprep.subr.bf16.mxu0 %v1182
    %1719 = vmatpush1.bf16.msra.mxu0 %v1181
    %1720 = vmatprep.subr.bf16.mxu0 %v1186
    %1721 = vmatpush1.bf16.msra.mxu0 %v1185
    %1722 = vmatprep.subr.bf16.mxu0 %v1190
    %1723 = vmatpush1.bf16.msra.mxu0 %v1189
    %1724 = vmatprep.subr.bf16.mxu0 %v1194
    %1725 = vmatpush1.bf16.msra.mxu0 %v1193
    %1726 = vmatprep.subr.bf16.mxu0 %v1198
    %1727 = vmatpush1.bf16.msra.mxu0 %v1197
    %1728 = vmatprep.subr.bf16.mxu0 %v1202
    %1729 = vmatpush1.bf16.msra.mxu0 %v1201
    %1730 = vmatprep.subr.bf16.mxu0 0
    %1731 = vmatpush1.bf16.msra.mxu0 0
    %1732 = vmatprep.subr.bf16.mxu0 0
    %1733 = vmatpush1.bf16.msra.mxu0 0
    %1734 = vmatprep.subr.bf16.mxu0 0
    %1735 = vmatpush1.bf16.msra.mxu0 0
    %1736 = vmatprep.subr.bf16.mxu0 0
    %1737 = vmatpush1.bf16.msra.mxu0 0
    %1738 = vmatprep.subr.bf16.mxu0 0
    %1739 = vmatpush1.bf16.msra.mxu0 0
    %1740 = vmatprep.subr.bf16.mxu0 0
    %1741 = vmatpush1.bf16.msra.mxu0 0
    %1742 = vmatprep.subr.bf16.mxu0 0
    %1743 = vmatpush1.bf16.msra.mxu0 0
    %1744 = vmatprep.subr.bf16.mxu0 0
    %1745 = vmatpush1.bf16.msra.mxu0 0
    %1746 = vmatprep.mubr.bf16.mxu0 0
    %1747 = vmatmul.mubr.bf16.gmra.mrb[0].mxu0 %v299
    %v1748 = vpop.f32.mrb[0].mxu0
    %v1749 = vadd.f32 %v1708, %v1748
    %v1750 = vpop.f32.mrb[0].mxu0
    %v1751 = vadd.f32 %v1710, %v1750
    %v1752 = vpop.f32.mrb[0].mxu0
    %v1753 = vpop.f32.mrb[0].mxu0
    %1754 = vdwg.mxu0
    %v1755 = vadd.f32 %v50, %v1585
    %v1756 = vadd.f32 %v51, %v1587
    %v1757 = vadd.f32 %v52, %v1749
    %v1758 = vadd.f32 %v53, %v1751
    %1759 = vst [vmem:[#allocation2] sm:$0xff] %v1755
    %1760 = vst [vmem:[#allocation2 + $0x8] sm:$0xff] %v1756
    %1761 = vst [vmem:[#allocation2 + $0x10] sm:$0xff] %v1757
    %1762 = vst [vmem:[#allocation2 + $0x18] sm:$0xff] %v1758
    // Predicated region
    $region26: #{tpu_custom_call.1} parent=1 // pred_check
      %p1763 = pneg %p42
    $region27: #{tpu_custom_call.1} parent=1 // pred_check_branch
      %1765 = sbr.rel (%p1763) target = $region29
    $region28: #{tpu_custom_call.1} parent=1 // pred_region
      %v1766 = vld [vmem:[#allocation2] sm:$0xff]
      %v1767 = vld [vmem:[#allocation2 + $0x8] sm:$0xff]
      %v1768 = vld [vmem:[#allocation2 + $0x10] sm:$0xff]
      %v1769 = vld [vmem:[#allocation2 + $0x18] sm:$0xff]
      %v1770 = vld [vmem:[%s2] sm:$0xf]
      %v1772 = vlaneseq
      %v1773 = vshrl.u32 %v1772, 7
      %v1774 = vsub.s32 0, %v1773
      %v1775 = vrot.slane %v1770, %v1774
      %v1776 = vlaneseq
      %v1777 = vshrl.u32 %v1776, 7
      %v1778 = vsub.s32 1, %v1777
      %v1779 = vrot.slane %v1770, %v1778
      %v1780 = vlaneseq
      %v1781 = vshrl.u32 %v1780, 7
      %v1782 = vsub.s32 2, %v1781
      %v1783 = vrot.slane %v1770, %v1782
      %v1784 = vlaneseq
      %v1785 = vshrl.u32 %v1784, 7
      %v1786 = vsub.s32 3, %v1785
      %v1787 = vrot.slane %v1770, %v1786
      %v1792 = vadd.f32 %v1766, %v1775
      %v1793 = vadd.f32 %v1767, %v1779
      %v1794 = vadd.f32 %v1768, %v1783
      %v1795 = vadd.f32 %v1769, %v1787
      %v1796 = vmax.f32 %v1792, 0.0
      %v1797 = vmax.f32 %v1793, 0.0
      %v1798 = vmax.f32 %v1794, 0.0
      %v1799 = vmax.f32 %v1795, 0.0
      %1800 = vst [vmem:[#allocation8] sm:$0xff] %v1796
      %1801 = vst [vmem:[#allocation8 + $0x8] sm:$0xff] %v1797
      %1802 = vst [vmem:[#allocation8 + $0x10] sm:$0xff] %v1798
      %1803 = vst [vmem:[#allocation8 + $0x18] sm:$0xff] %v1799
    $region29: #{tpu_custom_call.1} parent=1 // pred_fallthru
      _
    // Predicated region
    $region30: #{tpu_custom_call.1} parent=1 // pred_check
      _
    $region31: #{tpu_custom_call.1} parent=1 // pred_check_branch
      %1805 = sbr.rel (0) target = $region33
    $region32: #{tpu_custom_call.1} parent=1 // pred_region
      %s1807 = ssub.s32 512, 512
      %1808 = vsyncadd [#allocation5], %s1807
      %s1810 = sshll.u32 [#allocation8], 4
      %s1811 = int_to_ptr.vmem [resolvable:$true] %s1810
      %1813 = dma.vmem_to_hbm [thread:$0]  %s1811, 512, %s3, [#allocation5]
    $region33: #{tpu_custom_call.1} parent=1 // pred_fallthru
      _
    // Predicated region
    $region34: #{tpu_custom_call.1} parent=1 // pred_check
      _
    $region35: #{tpu_custom_call.1} parent=1 // pred_check_branch
      %1815 = sbr.rel (0) target = $region37
    $region36: #{tpu_custom_call.1} parent=1 // pred_region
      %1816 = dma.done [#allocation5], 512
    $region37: #{tpu_custom_call.1} parent=1 // pred_fallthru
      _
    %1817 = vsyncpa [#allocation4], 1
    %1818 = vsyncpa [#allocation7], 1
    %1819 = vsyncpa [#allocation5], 1

</llo_original>
